<compile_context>
chip_gen: v7x
topology: tpu7x:2x2x1
jax: 0.10.0
libtpu: 0.0.40
codegen_flags: <defaults>
</compile_context>

<pallas_src>
import functools

import jax
import jax.numpy as jnp
from jax.experimental import pallas as pl
from jax.experimental.pallas import tpu as pltpu

LANE = 128      # pad every feature dim to the lane width
SUBLANE = 8


def _round_up(x, m):
    return ((x + m - 1) // m) * m


def residual_nn_kernel(ctx_ref, wf_ref, wblk_ref, wl_ref, bias_ref, out_ref):
    # ctx_ref : [TB, IN_P]         f32
    # wf_ref  : [IN_P, HID_P]      bf16
    # wblk_ref: [4, HID_P, HID_P]  bf16   (w00, w01, w10, w11)
    # wl_ref  : [HID_P, OUT_P]     bf16
    # bias_ref: [6, HID_P]         f32    (bf, b00, b01, b10, b11, bl)
    # out_ref : [TB, OUT_P]        f32
    bias = bias_ref[...]

    def matmul(x_f32, w_bf16):
        # bf16 operands, f32 accumulation on the MXU.
        return jnp.dot(x_f32.astype(jnp.bfloat16), w_bf16,
                       preferred_element_type=jnp.float32)

    # first + relu
    h = jnp.maximum(matmul(ctx_ref[...], wf_ref[...]) + bias[0:1, :], 0.0)

    # residual block 0
    t = jnp.maximum(matmul(h, wblk_ref[0]) + bias[1:2, :], 0.0)
    t = matmul(t, wblk_ref[1]) + bias[2:3, :]
    h = jnp.maximum(h + t, 0.0)

    # residual block 1
    t = jnp.maximum(matmul(h, wblk_ref[2]) + bias[3:4, :], 0.0)
    t = matmul(t, wblk_ref[3]) + bias[4:5, :]
    h = jnp.maximum(h + t, 0.0)

    # last (no activation), lane-dense store (OUT_P = 128)
    out_ref[...] = (matmul(h, wl_ref[...]) + bias[5:6, :]).astype(out_ref.dtype)


def _pad2(a, rows, cols):
    out = jnp.zeros((rows, cols), a.dtype)
    return out.at[:a.shape[0], :a.shape[1]].set(a)


def pack_params(p, in_p, hid_p, out_p):
    """Zero-pad feature dims to lane width and pack into 4 weight/bias operands."""
    wf = _pad2(p["wf"], in_p, hid_p).astype(jnp.bfloat16)
    wblk = jnp.stack([_pad2(p[k], hid_p, hid_p)
                      for k in ("w00", "w01", "w10", "w11")]).astype(jnp.bfloat16)
    wl = _pad2(p["wl"], hid_p, out_p).astype(jnp.bfloat16)
    bias = jnp.stack([_pad2(p[k], 1, hid_p)[0]
                      for k in ("bf", "b00", "b01", "b10", "b11", "bl")]
                     ).astype(jnp.float32)
    return wf, wblk, wl, bias


@functools.partial(jax.jit, static_argnames=("batch_tile",))
def residual_nn_forward(inputs, context, params, *, batch_tile=256):
    """Pallas forward. `inputs` is accepted but unused (matches the PyTorch module)."""
    del inputs  # unused in the reference PyTorch forward
    B, in_dim = context.shape
    hidden = params["wf"].shape[1]
    out_dim = params["wl"].shape[1]

    in_p = _round_up(in_dim, LANE)
    hid_p = _round_up(hidden, LANE)
    out_p = _round_up(max(out_dim, hidden), LANE)
    assert out_p == hid_p  # packed bias array is hid_p wide

    tb = min(batch_tile, _round_up(B, SUBLANE))   # batch tile (multiple of 8)
    b_pad = _round_up(B, tb)
    grid = (b_pad // tb,)

    # Pad batch + feature dims with zeros; extra rows/cols are sliced off below.
    ctx_p = jnp.zeros((b_pad, in_p), jnp.float32).at[:B, :in_dim].set(
        context.astype(jnp.float32))
    wf, wblk, wl, bias = pack_params(params, in_p, hid_p, out_p)

    out_padded = pl.pallas_call(
        residual_nn_kernel,
        out_shape=jax.ShapeDtypeStruct((b_pad, out_p), jnp.float32),
        grid_spec=pl.GridSpec(
            grid=grid,
            in_specs=[
                pl.BlockSpec((tb, in_p), lambda i: (i, 0)),            # context tile
                pl.BlockSpec((in_p, hid_p), lambda i: (0, 0)),         # first weight
                pl.BlockSpec((4, hid_p, hid_p), lambda i: (0, 0, 0)),  # block weights
                pl.BlockSpec((hid_p, out_p), lambda i: (0, 0)),        # last weight
                pl.BlockSpec((6, hid_p), lambda i: (0, 0)),            # biases
            ],
            out_specs=pl.BlockSpec((tb, out_p), lambda i: (i, 0)),
        ),
        compiler_params=pltpu.CompilerParams(
            dimension_semantics=("parallel",)),   # batch tiles are independent
    )(ctx_p, wf, wblk, wl, bias)

    return out_padded[:B, :out_dim]


def init_params(key, input_dim, hidden, output_dim):
    """Deterministic init mimicking nn.Linear's U(-1/sqrt(fan_in), 1/sqrt(fan_in)).
    Weights stored as [in, out] (transpose of PyTorch's [out, in])."""
    def linear(k, fan_in, fan_out):
        kw, kb = jax.random.split(k)
        bound = 1.0 / jnp.sqrt(float(fan_in))
        w = jax.random.uniform(kw, (fan_in, fan_out), jnp.float32, -bound, bound)
        b = jax.random.uniform(kb, (1, fan_out), jnp.float32, -bound, bound)
        return w, b

    keys = jax.random.split(key, 6)
    wf, bf = linear(keys[0], input_dim, hidden)
    w00, b00 = linear(keys[1], hidden, hidden)
    w01, b01 = linear(keys[2], hidden, hidden)
    w10, b10 = linear(keys[3], hidden, hidden)
    w11, b11 = linear(keys[4], hidden, hidden)
    wl, bl = linear(keys[5], hidden, output_dim)
    return dict(wf=wf, bf=bf, w00=w00, b00=b00, w01=w01, b01=b01,
                w10=w10, b10=b10, w11=w11, b11=b11, wl=wl, bl=bl)


def residual_nn_ref(context, p):
    """Pure-JAX f32 reference of the PyTorch forward, for correctness check."""
    h = jnp.maximum(context @ p["wf"] + p["bf"], 0.0)
    for a, b_, c, d in (("w00", "b00", "w01", "b01"), ("w10", "b10", "w11", "b11")):
        t = jnp.maximum(h @ p[a] + p[b_], 0.0)
        t = t @ p[c] + p[d]
        h = jnp.maximum(h + t, 0.0)
    return h @ p["wl"] + p["bl"]


if __name__ == "__main__":
    key = jax.random.PRNGKey(0)
    k_ctx, k_in, k_par = jax.random.split(key, 3)

    batch = 512          # two 256-row batch tiles -> exercises the batch grid
    input_dim = 16       # context feature dim (first linear in_features)
    hidden = 32          # hidden_features
    output_dim = 8       # output_dim
    # num_blocks = 2 (hard-wired into the kernel, matching the default)

    context = jax.random.normal(k_ctx, (batch, input_dim), jnp.float32)
    inputs = jax.random.normal(k_in, (batch, output_dim), jnp.float32)  # unused
    params = init_params(k_par, input_dim, hidden, output_dim)

    out = residual_nn_forward(inputs, context, params, batch_tile=256)
    out = jax.block_until_ready(out)

    ref = residual_nn_ref(context, params)
    assert out.shape == (batch, output_dim)
    # bf16 matmul operands (f32 accumulation) -> relaxed tolerance vs f32 reference
    assert jnp.allclose(out, ref, atol=5e-2, rtol=5e-2), (
        "mismatch vs JAX reference; max abs err = "
        f"{float(jnp.max(jnp.abs(out - ref)))}")
    print("KERNEL_OK")
</pallas_src>

<mosaic_0001>
module attributes {stable_mosaic.version = 11 : i64} {
  func.func @residual_nn_kernel(%arg0: i32, %arg1: memref<256x128xf32, #tpu.memory_space<vmem>>, %arg2: memref<128x128xbf16, #tpu.memory_space<vmem>>, %arg3: memref<4x128x128xbf16, #tpu.memory_space<vmem>>, %arg4: memref<128x128xbf16, #tpu.memory_space<vmem>>, %arg5: memref<6x128xf32, #tpu.memory_space<vmem>>, %arg6: memref<256x128xf32, #tpu.memory_space<vmem>>) attributes {dimension_semantics = [#tpu.dimension_semantics<parallel>], iteration_bounds = array<i64: 2>, scalar_prefetch = 0 : i64, scratch_operands = 0 : i64, tpu.core_type = #tpu.core_type<tc>, window_params = [{transform_indices = @transform_0, window_bounds = array<i64: 256, 128>}, {pipeline_mode = #tpu.pipeline_mode<synchronous>, transform_indices = @transform_1, window_bounds = array<i64: 128, 128>}, {pipeline_mode = #tpu.pipeline_mode<synchronous>, transform_indices = @transform_2, window_bounds = array<i64: 4, 128, 128>}, {pipeline_mode = #tpu.pipeline_mode<synchronous>, transform_indices = @transform_3, window_bounds = array<i64: 128, 128>}, {pipeline_mode = #tpu.pipeline_mode<synchronous>, transform_indices = @transform_4, window_bounds = array<i64: 6, 128>}, {transform_indices = @transform_5, window_bounds = array<i64: 256, 128>}]} {
    %c0 = arith.constant 0 : index
    %c0_0 = arith.constant 0 : index
    %0 = vector.load %arg5[%c0, %c0_0] : memref<6x128xf32, #tpu.memory_space<vmem>>, vector<6x128xf32>
    %c0_1 = arith.constant 0 : index
    %c0_2 = arith.constant 0 : index
    %1 = vector.load %arg1[%c0_1, %c0_2] : memref<256x128xf32, #tpu.memory_space<vmem>>, vector<256x128xf32>
    %c0_3 = arith.constant 0 : index
    %c0_4 = arith.constant 0 : index
    %2 = vector.load %arg2[%c0_3, %c0_4] : memref<128x128xbf16, #tpu.memory_space<vmem>>, vector<128x128xbf16>
    %3 = arith.truncf %1 : vector<256x128xf32> to vector<256x128xbf16>
    %cst = arith.constant dense<0.000000e+00> : vector<256x128xf32>
    %4 = tpu.matmul %3, %2, %cst {dimension_numbers = #tpu.dot_dimension_numbers<[1], [0], [0], [1], [0, 0, 1, 1], [], []>} : vector<256x128xbf16>, vector<128x128xbf16>, vector<256x128xf32> -> vector<256x128xf32>
    %5 = vector.extract_strided_slice %0 {offsets = [0, 0], sizes = [1, 128], strides = [1, 1]} : vector<6x128xf32> to vector<1x128xf32>
    %6 = vector.broadcast %5 : vector<1x128xf32> to vector<256x128xf32>
    %7 = arith.addf %4, %6 : vector<256x128xf32>
    %cst_5 = arith.constant 0.000000e+00 : f32
    %8 = vector.broadcast %cst_5 : f32 to vector<256x128xf32>
    %9 = arith.maximumf %7, %8 : vector<256x128xf32>
    %c0_6 = arith.constant 0 : index
    %c0_7 = arith.constant 0 : index
    %c0_8 = arith.constant 0 : index
    %10 = vector.load %arg3[%c0_6, %c0_7, %c0_8] : memref<4x128x128xbf16, #tpu.memory_space<vmem>>, vector<1x128x128xbf16>
    %11 = vector.shape_cast %10 : vector<1x128x128xbf16> to vector<128x128xbf16>
    %12 = arith.truncf %9 : vector<256x128xf32> to vector<256x128xbf16>
    %cst_9 = arith.constant dense<0.000000e+00> : vector<256x128xf32>
    %13 = tpu.matmul %12, %11, %cst_9 {dimension_numbers = #tpu.dot_dimension_numbers<[1], [0], [0], [1], [0, 0, 1, 1], [], []>} : vector<256x128xbf16>, vector<128x128xbf16>, vector<256x128xf32> -> vector<256x128xf32>
    %14 = vector.extract_strided_slice %0 {offsets = [1, 0], sizes = [1, 128], strides = [1, 1]} : vector<6x128xf32> to vector<1x128xf32>
    %15 = vector.broadcast %14 : vector<1x128xf32> to vector<256x128xf32>
    %16 = arith.addf %13, %15 : vector<256x128xf32>
    %cst_10 = arith.constant 0.000000e+00 : f32
    %17 = vector.broadcast %cst_10 : f32 to vector<256x128xf32>
    %18 = arith.maximumf %16, %17 : vector<256x128xf32>
    %c1 = arith.constant 1 : index
    %c0_11 = arith.constant 0 : index
    %c0_12 = arith.constant 0 : index
    %19 = vector.load %arg3[%c1, %c0_11, %c0_12] : memref<4x128x128xbf16, #tpu.memory_space<vmem>>, vector<1x128x128xbf16>
    %20 = vector.shape_cast %19 : vector<1x128x128xbf16> to vector<128x128xbf16>
    %21 = arith.truncf %18 : vector<256x128xf32> to vector<256x128xbf16>
    %cst_13 = arith.constant dense<0.000000e+00> : vector<256x128xf32>
    %22 = tpu.matmul %21, %20, %cst_13 {dimension_numbers = #tpu.dot_dimension_numbers<[1], [0], [0], [1], [0, 0, 1, 1], [], []>} : vector<256x128xbf16>, vector<128x128xbf16>, vector<256x128xf32> -> vector<256x128xf32>
    %23 = vector.extract_strided_slice %0 {offsets = [2, 0], sizes = [1, 128], strides = [1, 1]} : vector<6x128xf32> to vector<1x128xf32>
    %24 = vector.broadcast %23 : vector<1x128xf32> to vector<256x128xf32>
    %25 = arith.addf %22, %24 : vector<256x128xf32>
    %26 = arith.addf %9, %25 : vector<256x128xf32>
    %cst_14 = arith.constant 0.000000e+00 : f32
    %27 = vector.broadcast %cst_14 : f32 to vector<256x128xf32>
    %28 = arith.maximumf %26, %27 : vector<256x128xf32>
    %c2 = arith.constant 2 : index
    %c0_15 = arith.constant 0 : index
    %c0_16 = arith.constant 0 : index
    %29 = vector.load %arg3[%c2, %c0_15, %c0_16] : memref<4x128x128xbf16, #tpu.memory_space<vmem>>, vector<1x128x128xbf16>
    %30 = vector.shape_cast %29 : vector<1x128x128xbf16> to vector<128x128xbf16>
    %31 = arith.truncf %28 : vector<256x128xf32> to vector<256x128xbf16>
    %cst_17 = arith.constant dense<0.000000e+00> : vector<256x128xf32>
    %32 = tpu.matmul %31, %30, %cst_17 {dimension_numbers = #tpu.dot_dimension_numbers<[1], [0], [0], [1], [0, 0, 1, 1], [], []>} : vector<256x128xbf16>, vector<128x128xbf16>, vector<256x128xf32> -> vector<256x128xf32>
    %33 = vector.extract_strided_slice %0 {offsets = [3, 0], sizes = [1, 128], strides = [1, 1]} : vector<6x128xf32> to vector<1x128xf32>
    %34 = vector.broadcast %33 : vector<1x128xf32> to vector<256x128xf32>
    %35 = arith.addf %32, %34 : vector<256x128xf32>
    %cst_18 = arith.constant 0.000000e+00 : f32
    %36 = vector.broadcast %cst_18 : f32 to vector<256x128xf32>
    %37 = arith.maximumf %35, %36 : vector<256x128xf32>
    %c3 = arith.constant 3 : index
    %c0_19 = arith.constant 0 : index
    %c0_20 = arith.constant 0 : index
    %38 = vector.load %arg3[%c3, %c0_19, %c0_20] : memref<4x128x128xbf16, #tpu.memory_space<vmem>>, vector<1x128x128xbf16>
    %39 = vector.shape_cast %38 : vector<1x128x128xbf16> to vector<128x128xbf16>
    %40 = arith.truncf %37 : vector<256x128xf32> to vector<256x128xbf16>
    %cst_21 = arith.constant dense<0.000000e+00> : vector<256x128xf32>
    %41 = tpu.matmul %40, %39, %cst_21 {dimension_numbers = #tpu.dot_dimension_numbers<[1], [0], [0], [1], [0, 0, 1, 1], [], []>} : vector<256x128xbf16>, vector<128x128xbf16>, vector<256x128xf32> -> vector<256x128xf32>
    %42 = vector.extract_strided_slice %0 {offsets = [4, 0], sizes = [1, 128], strides = [1, 1]} : vector<6x128xf32> to vector<1x128xf32>
    %43 = vector.broadcast %42 : vector<1x128xf32> to vector<256x128xf32>
    %44 = arith.addf %41, %43 : vector<256x128xf32>
    %45 = arith.addf %28, %44 : vector<256x128xf32>
    %cst_22 = arith.constant 0.000000e+00 : f32
    %46 = vector.broadcast %cst_22 : f32 to vector<256x128xf32>
    %47 = arith.maximumf %45, %46 : vector<256x128xf32>
    %c0_23 = arith.constant 0 : index
    %c0_24 = arith.constant 0 : index
    %48 = vector.load %arg4[%c0_23, %c0_24] : memref<128x128xbf16, #tpu.memory_space<vmem>>, vector<128x128xbf16>
    %49 = arith.truncf %47 : vector<256x128xf32> to vector<256x128xbf16>
    %cst_25 = arith.constant dense<0.000000e+00> : vector<256x128xf32>
    %50 = tpu.matmul %49, %48, %cst_25 {dimension_numbers = #tpu.dot_dimension_numbers<[1], [0], [0], [1], [0, 0, 1, 1], [], []>} : vector<256x128xbf16>, vector<128x128xbf16>, vector<256x128xf32> -> vector<256x128xf32>
    %51 = vector.extract_strided_slice %0 {offsets = [5, 0], sizes = [1, 128], strides = [1, 1]} : vector<6x128xf32> to vector<1x128xf32>
    %52 = vector.broadcast %51 : vector<1x128xf32> to vector<256x128xf32>
    %53 = arith.addf %50, %52 : vector<256x128xf32>
    %c0_26 = arith.constant 0 : index
    %c0_27 = arith.constant 0 : index
    %54 = vector.load %arg6[%c0_26, %c0_27] : memref<256x128xf32, #tpu.memory_space<vmem>>, vector<256x128xf32>
    tpu.vector_store %arg6[%c0_26, %c0_27], %53 {strides = array<i32>} : memref<256x128xf32, #tpu.memory_space<vmem>>, vector<256x128xf32>,
    return
  }
  func.func @transform_0(%arg0: i32) -> (i32, i32) {
    %c0_i32 = arith.constant 0 : i32
    %c0_i32_0 = arith.constant 0 : i32
    return %arg0, %c0_i32 : i32, i32
  }
  func.func @transform_1(%arg0: i32) -> (i32, i32) {
    %c0_i32 = arith.constant 0 : i32
    %c0_i32_0 = arith.constant 0 : i32
    %c0_i32_1 = arith.constant 0 : i32
    return %c0_i32, %c0_i32_0 : i32, i32
  }
  func.func @transform_2(%arg0: i32) -> (i32, i32, i32) {
    %c0_i32 = arith.constant 0 : i32
    %c0_i32_0 = arith.constant 0 : i32
    %c0_i32_1 = arith.constant 0 : i32
    %c0_i32_2 = arith.constant 0 : i32
    return %c0_i32, %c0_i32_0, %c0_i32_1 : i32, i32, i32
  }
  func.func @transform_3(%arg0: i32) -> (i32, i32) {
    %c0_i32 = arith.constant 0 : i32
    %c0_i32_0 = arith.constant 0 : i32
    %c0_i32_1 = arith.constant 0 : i32
    return %c0_i32, %c0_i32_0 : i32, i32
  }
  func.func @transform_4(%arg0: i32) -> (i32, i32) {
    %c0_i32 = arith.constant 0 : i32
    %c0_i32_0 = arith.constant 0 : i32
    %c0_i32_1 = arith.constant 0 : i32
    return %c0_i32, %c0_i32_0 : i32, i32
  }
  func.func @transform_5(%arg0: i32) -> (i32, i32) {
    %c0_i32 = arith.constant 0 : i32
    %c0_i32_0 = arith.constant 0 : i32
    return %arg0, %c0_i32 : i32, i32
  }
}

</mosaic_0001>

<llo_original>
// kernel: residual_nn_forward.1
$region0: #{residual_nn_forward.1}
  #allocation0 [shape = 'u32[]', space=smem, size = 0x4, offset = 0x4, fixed_abs, tag = 'smem constant byte address 0x4 - core index']
  #allocation1 [shape = 'u32[144,128]{1,0:T(1,128)}', space=vmem, size = 0x12000, scoped, tag = 'internal scratch']
  %s0 = inlined_call_operand.vmem [shape: f32[512,128], index: 0, kind: input, shape index: {}]
  %s1 = inlined_call_operand.vmem [shape: bf16[128,128], index: 1, kind: input, shape index: {}]
  %s2 = inlined_call_operand.vmem [shape: bf16[4,128,128], index: 2, kind: input, shape index: {}]
  %s3 = inlined_call_operand.vmem [shape: bf16[128,128], index: 3, kind: input, shape index: {}]
  %s4 = inlined_call_operand.vmem [shape: f32[6,128], index: 4, kind: input, shape index: {}]
  %s5 = inlined_call_operand.vmem [shape: f32[512,128], index: 5, kind: output, shape index: {}]
  %s6 = sld [smem:[#allocation0]]
  $region53: #{residual_nn_forward.1} parent=0
    _
  %s8 = ssub.s32 1, %s6
  %s9 = scalar_select 0, %s8, %s6
  loop: start=0, step=1, limit=4
  $region2: #{residual_nn_forward.1} parent=0 // loop_pre_header
    _
  $region3: #{residual_nn_forward.1} parent=0 // loop_header
    %s11 = sphi 0, %s15
    %p12 = scmp.ge.s32.totalorder %s11, 4
    %s21 = sphi 0, %s23
    %s24 = sphi 0, %s21
    %s25 = sphi 0, %s24
    %s41 = sphi 0, %s25
    %s45 = sphi 0, %s45
    %s47 = sphi 0, %s45
    %s48 = sphi 0, %s47
    %s62 = sphi 0, %s48
    %s66 = sphi 0, %s66
    %s68 = sphi 0, %s66
    %s69 = sphi 0, %s68
    %s83 = sphi 0, %s69
    %s87 = sphi 0, %s87
    %s89 = sphi 0, %s87
    %s90 = sphi 0, %s89
    %s104 = sphi 0, %s90
    %s108 = sphi 0, %s108
    %s110 = sphi 0, %s108
    %s111 = sphi 0, %s110
    %s125 = sphi 0, %s111
    %s131 = sphi 0, %s133
    %s134 = sphi 0, %s131
    %s135 = sphi 0, %s134
    %s151 = sphi 0, %s135
  $region4: #{residual_nn_forward.1} parent=0 // loop_header_branch
    %14 = sbr.rel (%p12) target = $region8
  $region5: #{residual_nn_forward.1} parent=0 // loop_body
    %s16 = ssub.s32 %s11, 1
    %s17 = ssub.s32 %s11, 2
    %s18 = sadd.s32 %s11, 1
    %s19 = ssub.s32 %s11, %s18
    %p20 = scmp.eq.s32.totalorder %s19, 0
    %s22 = sadd.s32 %s21, 1
    %s23 = scalar_select %p20, %s21, %s22
    %p26 = pneg %p20
    %p27 = scmp.eq.s32.totalorder %s11, 1
    %p28 = por %p26, %p27
    %p29 = scmp.ne.s32.totalorder %s21, %s24
    %p30 = scmp.eq.s32.totalorder %s11, 0
    %p31 = por %p29, %p30
    %p32 = scmp.ne.s32.totalorder %s21, %s24
    %p33 = scmp.eq.s32.totalorder %s16, 1
    %p34 = por %p32, %p33
    %p35 = scmp.ne.s32.totalorder %s24, %s25
    %p36 = scmp.eq.s32.totalorder %s16, 0
    %p37 = por %p35, %p36
    %p38 = scmp.ne.s32.totalorder %s24, %s25
    %p39 = scmp.eq.s32.totalorder %s17, 1
    %p40 = por %p38, %p39
    %p42 = scmp.ne.s32.totalorder %s25, %s41
    %p43 = scmp.eq.s32.totalorder %s17, 0
    %p44 = por %p42, %p43
    %s46 = sadd.s32 %s45, 1
    %p49 = scmp.eq.s32.totalorder %s11, 1
    %p50 = scmp.ne.s32.totalorder %s45, %s47
    %p51 = scmp.eq.s32.totalorder %s11, 0
    %p52 = por %p50, %p51
    %p53 = scmp.ne.s32.totalorder %s45, %s47
    %p54 = scmp.eq.s32.totalorder %s16, 1
    %p55 = por %p53, %p54
    %p56 = scmp.ne.s32.totalorder %s47, %s48
    %p57 = scmp.eq.s32.totalorder %s16, 0
    %p58 = por %p56, %p57
    %p59 = scmp.ne.s32.totalorder %s47, %s48
    %p60 = scmp.eq.s32.totalorder %s17, 1
    %p61 = por %p59, %p60
    %p63 = scmp.ne.s32.totalorder %s48, %s62
    %p64 = scmp.eq.s32.totalorder %s17, 0
    %p65 = por %p63, %p64
    %s67 = sadd.s32 %s66, 1
    %p70 = scmp.eq.s32.totalorder %s11, 1
    %p71 = scmp.ne.s32.totalorder %s66, %s68
    %p72 = scmp.eq.s32.totalorder %s11, 0
    %p73 = por %p71, %p72
    %p74 = scmp.ne.s32.totalorder %s66, %s68
    %p75 = scmp.eq.s32.totalorder %s16, 1
    %p76 = por %p74, %p75
    %p77 = scmp.ne.s32.totalorder %s68, %s69
    %p78 = scmp.eq.s32.totalorder %s16, 0
    %p79 = por %p77, %p78
    %p80 = scmp.ne.s32.totalorder %s68, %s69
    %p81 = scmp.eq.s32.totalorder %s17, 1
    %p82 = por %p80, %p81
    %p84 = scmp.ne.s32.totalorder %s69, %s83
    %p85 = scmp.eq.s32.totalorder %s17, 0
    %p86 = por %p84, %p85
    %s88 = sadd.s32 %s87, 1
    %p91 = scmp.eq.s32.totalorder %s11, 1
    %p92 = scmp.ne.s32.totalorder %s87, %s89
    %p93 = scmp.eq.s32.totalorder %s11, 0
    %p94 = por %p92, %p93
    %p95 = scmp.ne.s32.totalorder %s87, %s89
    %p96 = scmp.eq.s32.totalorder %s16, 1
    %p97 = por %p95, %p96
    %p98 = scmp.ne.s32.totalorder %s89, %s90
    %p99 = scmp.eq.s32.totalorder %s16, 0
    %p100 = por %p98, %p99
    %p101 = scmp.ne.s32.totalorder %s89, %s90
    %p102 = scmp.eq.s32.totalorder %s17, 1
    %p103 = por %p101, %p102
    %p105 = scmp.ne.s32.totalorder %s90, %s104
    %p106 = scmp.eq.s32.totalorder %s17, 0
    %p107 = por %p105, %p106
    %s109 = sadd.s32 %s108, 1
    %p112 = scmp.eq.s32.totalorder %s11, 1
    %p113 = scmp.ne.s32.totalorder %s108, %s110
    %p114 = scmp.eq.s32.totalorder %s11, 0
    %p115 = por %p113, %p114
    %p116 = scmp.ne.s32.totalorder %s108, %s110
    %p117 = scmp.eq.s32.totalorder %s16, 1
    %p118 = por %p116, %p117
    %p119 = scmp.ne.s32.totalorder %s110, %s111
    %p120 = scmp.eq.s32.totalorder %s16, 0
    %p121 = por %p119, %p120
    %p122 = scmp.ne.s32.totalorder %s110, %s111
    %p123 = scmp.eq.s32.totalorder %s17, 1
    %p124 = por %p122, %p123
    %p126 = scmp.ne.s32.totalorder %s111, %s125
    %p127 = scmp.eq.s32.totalorder %s17, 0
    %p128 = por %p126, %p127
    %s129 = ssub.s32 %s11, %s18
    %p130 = scmp.eq.s32.totalorder %s129, 0
    %s132 = sadd.s32 %s131, 1
    %s133 = scalar_select %p130, %s131, %s132
    %p136 = pneg %p130
    %p137 = scmp.eq.s32.totalorder %s11, 1
    %p138 = por %p136, %p137
    %p139 = scmp.ne.s32.totalorder %s131, %s134
    %p140 = scmp.eq.s32.totalorder %s11, 0
    %p141 = por %p139, %p140
    %p142 = scmp.ne.s32.totalorder %s131, %s134
    %p143 = scmp.eq.s32.totalorder %s16, 1
    %p144 = por %p142, %p143
    %p145 = scmp.ne.s32.totalorder %s134, %s135
    %p146 = scmp.eq.s32.totalorder %s16, 0
    %p147 = por %p145, %p146
    %p148 = scmp.ne.s32.totalorder %s134, %s135
    %p149 = scmp.eq.s32.totalorder %s17, 1
    %p150 = por %p148, %p149
    %p152 = scmp.ne.s32.totalorder %s135, %s151
    %p153 = scmp.eq.s32.totalorder %s17, 0
    %p154 = por %p152, %p153
    %p155 = scmp.le.s32.totalorder 1, %s11
    %p156 = scmp.lt.s32.totalorder %s11, 3
    %p157 = pnand %p155, %p156
    %p158 = pneg %p157
    // Predicated region
    $region9: #{residual_nn_forward.1} parent=5 // pred_check
      _
    $region10: #{residual_nn_forward.1} parent=5 // pred_check_branch
      %160 = sbr.rel (%p157) target = $region12
    $region11: #{residual_nn_forward.1} parent=5 // pred_region
      %s161 = ssub.s32 %s11, 1
      // Predicated region
      $region13: #{residual_nn_forward.1} parent=11 // pred_check
        %p162 = pneg %p58
      $region14: #{residual_nn_forward.1} parent=11 // pred_check_branch
        %164 = sbr.rel (%p162) target = $region16
      $region15: #{residual_nn_forward.1} parent=11 // pred_region
        _
      $region16: #{residual_nn_forward.1} parent=11 // pred_fallthru
        _
      // Predicated region
      $region17: #{residual_nn_forward.1} parent=11 // pred_check
        %p165 = pneg %p79
      $region18: #{residual_nn_forward.1} parent=11 // pred_check_branch
        %167 = sbr.rel (%p165) target = $region20
      $region19: #{residual_nn_forward.1} parent=11 // pred_region
        _
      $region20: #{residual_nn_forward.1} parent=11 // pred_fallthru
        _
      // Predicated region
      $region21: #{residual_nn_forward.1} parent=11 // pred_check
        %p168 = pneg %p100
      $region22: #{residual_nn_forward.1} parent=11 // pred_check_branch
        %170 = sbr.rel (%p168) target = $region24
      $region23: #{residual_nn_forward.1} parent=11 // pred_region
        _
      $region24: #{residual_nn_forward.1} parent=11 // pred_fallthru
        _
      // Predicated region
      $region25: #{residual_nn_forward.1} parent=11 // pred_check
        %p171 = pneg %p121
      $region26: #{residual_nn_forward.1} parent=11 // pred_check_branch
        %173 = sbr.rel (%p171) target = $region28
      $region27: #{residual_nn_forward.1} parent=11 // pred_region
        _
      $region28: #{residual_nn_forward.1} parent=11 // pred_fallthru
        _
    $region12: #{residual_nn_forward.1} parent=5 // pred_fallthru
      _
    %p174 = scmp.lt.s32.totalorder %s11, 2
    // Predicated region
    $region29: #{residual_nn_forward.1} parent=5 // pred_check
      %p175 = pneg %p174
    $region30: #{residual_nn_forward.1} parent=5 // pred_check_branch
      %177 = sbr.rel (%p175) target = $region32
    $region31: #{residual_nn_forward.1} parent=5 // pred_region
      // Predicated region
      $region33: #{residual_nn_forward.1} parent=31 // pred_check
        %p178 = pneg %p31
      $region34: #{residual_nn_forward.1} parent=31 // pred_check_branch
        %180 = sbr.rel (%p178) target = $region36
      $region35: #{residual_nn_forward.1} parent=31 // pred_region
        %s181 = smul.u32 32, %s11
        %p182 = scmp.lt.s32.totalorder %s181, 63
        %s183 = scalar_select %p182, %s181, 63
        %s184 = smul.addr %s183, 8
        %s185 = scalar_lea.vmem %s0, %s184
        %s186 = smul.u32 32, %s11
      $region36: #{residual_nn_forward.1} parent=31 // pred_fallthru
        _
    $region32: #{residual_nn_forward.1} parent=5 // pred_fallthru
      _
    %p187 = scmp.le.s32.totalorder 1, %s11
    %p188 = scmp.lt.s32.totalorder %s11, 3
    %p189 = pnand %p187, %p188
    %p190 = pneg %p189
    // Predicated region
    $region37: #{residual_nn_forward.1} parent=5 // pred_check
      _
    $region38: #{residual_nn_forward.1} parent=5 // pred_check_branch
      %192 = sbr.rel (%p189) target = $region40
    $region39: #{residual_nn_forward.1} parent=5 // pred_region
      %s193 = ssub.s32 %s11, 1
      %s194 = smul.u32 32, %s16
      %p195 = scmp.lt.s32.totalorder %s194, 63
      %s196 = scalar_select %p195, %s194, 63
      %s197 = smul.addr %s196, 8
      %s198 = scalar_lea.vmem %s0, %s197
      %p199 = pneg %p37
      %p200 = pneg %p34
      %p201 = pneg %p58
      %p202 = pneg %p55
      %p203 = pneg %p79
      %p204 = pneg %p76
      %p205 = pneg %p100
      %p206 = pneg %p97
      %p207 = pneg %p121
      %p208 = pneg %p118
      %p209 = pneg %p147
      %p210 = pneg %p144
      %s211 = smul.u32 32, %s16
      %p212 = scmp.lt.s32.totalorder %s211, 63
      %s213 = scalar_select %p212, %s211, 63
      %s214 = smul.addr %s213, 8
      %s215 = scalar_lea.vmem %s5, %s214
      %s216 = smul.u32 32, %s16
      %p217 = scmp.lt.s32.totalorder %s216, 63
      %s218 = scalar_select %p217, %s216, 63
      %s219 = smul.addr %s218, 8
      %s220 = scalar_lea.vmem %s0, %s219
      %s221 = smul.u32 32, %s16
      %s222 = smul.u32 32, %s16
      %p223 = scmp.lt.s32.totalorder %s222, 63
      %s224 = scalar_select %p223, %s222, 63
      %s225 = smul.addr %s224, 8
      %s226 = scalar_lea.vmem %s5, %s225
      %s227 = smul.u32 32, %s16
      %v229 = vld [vmem:[%s4] sm:$0x3f]
      %v230 = vld [vmem:[%s220] sm:$0xff]
      %v231 = vld [vmem:[%s220 + $0x8] sm:$0xff]
      %v232 = vld [vmem:[%s220 + $0x10] sm:$0xff]
      %v233 = vld [vmem:[%s220 + $0x18] sm:$0xff]
      %v234 = vld [vmem:[%s220 + $0x20] sm:$0xff]
      %v235 = vld [vmem:[%s220 + $0x28] sm:$0xff]
      %v236 = vld [vmem:[%s220 + $0x30] sm:$0xff]
      %v237 = vld [vmem:[%s220 + $0x38] sm:$0xff]
      %v238 = vld [vmem:[%s220 + $0x40] sm:$0xff]
      %v239 = vld [vmem:[%s220 + $0x48] sm:$0xff]
      %v240 = vld [vmem:[%s220 + $0x50] sm:$0xff]
      %v241 = vld [vmem:[%s220 + $0x58] sm:$0xff]
      %v242 = vld [vmem:[%s220 + $0x60] sm:$0xff]
      %v243 = vld [vmem:[%s220 + $0x68] sm:$0xff]
      %v244 = vld [vmem:[%s220 + $0x70] sm:$0xff]
      %v245 = vld [vmem:[%s220 + $0x78] sm:$0xff]
      %v246 = vld [vmem:[%s220 + $0x80] sm:$0xff]
      %v247 = vld [vmem:[%s220 + $0x88] sm:$0xff]
      %v248 = vld [vmem:[%s220 + $0x90] sm:$0xff]
      %v249 = vld [vmem:[%s220 + $0x98] sm:$0xff]
      %v250 = vld [vmem:[%s220 + $0xa0] sm:$0xff]
      %v251 = vld [vmem:[%s220 + $0xa8] sm:$0xff]
      %v252 = vld [vmem:[%s220 + $0xb0] sm:$0xff]
      %v253 = vld [vmem:[%s220 + $0xb8] sm:$0xff]
      %v254 = vld [vmem:[%s220 + $0xc0] sm:$0xff]
      %v255 = vld [vmem:[%s220 + $0xc8] sm:$0xff]
      %v256 = vld [vmem:[%s220 + $0xd0] sm:$0xff]
      %v257 = vld [vmem:[%s220 + $0xd8] sm:$0xff]
      %v258 = vld [vmem:[%s220 + $0xe0] sm:$0xff]
      %v259 = vld [vmem:[%s220 + $0xe8] sm:$0xff]
      %v260 = vld [vmem:[%s220 + $0xf0] sm:$0xff]
      %v261 = vld [vmem:[%s220 + $0xf8] sm:$0xff]
      %v262 = vld [vmem:[%s1] sm:$0xf]
      %v263 = vld [vmem:[%s1 + $0x4] sm:$0xf]
      %v264 = vld [vmem:[%s1 + $0x8] sm:$0xf]
      %v265 = vld [vmem:[%s1 + $0xc] sm:$0xf]
      %v266 = vld [vmem:[%s1 + $0x10] sm:$0xf]
      %v267 = vld [vmem:[%s1 + $0x14] sm:$0xf]
      %v268 = vld [vmem:[%s1 + $0x18] sm:$0xf]
      %v269 = vld [vmem:[%s1 + $0x1c] sm:$0xf]
      %v270 = vld [vmem:[%s1 + $0x20] sm:$0xf]
      %v271 = vld [vmem:[%s1 + $0x24] sm:$0xf]
      %v272 = vld [vmem:[%s1 + $0x28] sm:$0xf]
      %v273 = vld [vmem:[%s1 + $0x2c] sm:$0xf]
      %v274 = vld [vmem:[%s1 + $0x30] sm:$0xf]
      %v275 = vld [vmem:[%s1 + $0x34] sm:$0xf]
      %v276 = vld [vmem:[%s1 + $0x38] sm:$0xf]
      %v277 = vld [vmem:[%s1 + $0x3c] sm:$0xf]
      %v278 = vpack.c.bf16 %v231, %v230
      %v279 = vpack.c.bf16 %v233, %v232
      %v280 = vpack.c.bf16 %v235, %v234
      %v281 = vpack.c.bf16 %v237, %v236
      %v282 = vpack.c.bf16 %v239, %v238
      %v283 = vpack.c.bf16 %v241, %v240
      %v284 = vpack.c.bf16 %v243, %v242
      %v285 = vpack.c.bf16 %v245, %v244
      %v286 = vpack.c.bf16 %v247, %v246
      %v287 = vpack.c.bf16 %v249, %v248
      %v288 = vpack.c.bf16 %v251, %v250
      %v289 = vpack.c.bf16 %v253, %v252
      %v290 = vpack.c.bf16 %v255, %v254
      %v291 = vpack.c.bf16 %v257, %v256
      %v292 = vpack.c.bf16 %v259, %v258
      %v293 = vpack.c.bf16 %v261, %v260
      %v294 = vlaneseq
      %v295 = vshrl.u32 %v294, 7
      %v296 = vsub.s32 0, %v295
      %v297 = vrot.slane %v229, %v296
      %v314 = vunpack.c.l.b16 %v262
      %v315 = vunpack.c.l.b16 %v263
      %v316 = vunpack.c.l.b16 %v264
      %v317 = vunpack.c.l.b16 %v265
      %v318 = vunpack.c.l.b16 %v266
      %v319 = vunpack.c.l.b16 %v267
      %v320 = vunpack.c.l.b16 %v268
      %v321 = vunpack.c.l.b16 %v269
      %v322 = vunpack.c.l.b16 %v270
      %v323 = vunpack.c.l.b16 %v271
      %v324 = vunpack.c.l.b16 %v272
      %v325 = vunpack.c.l.b16 %v273
      %v326 = vunpack.c.l.b16 %v274
      %v327 = vunpack.c.l.b16 %v275
      %v328 = vunpack.c.l.b16 %v276
      %v329 = vunpack.c.l.b16 %v277
      %v330 = vpack.c.b16 %v315, %v314
      %v331 = vpack.c.b16 %v317, %v316
      %v332 = vpack.c.b16 %v319, %v318
      %v333 = vpack.c.b16 %v321, %v320
      %v334 = vpack.c.b16 %v323, %v322
      %v335 = vpack.c.b16 %v325, %v324
      %v336 = vpack.c.b16 %v327, %v326
      %v337 = vpack.c.b16 %v329, %v328
      %346 = vmatprep.subr.bf16.mxu0 0
      %347 = vmatpush1.bf16.msra.mxu0 %v330
      %348 = vmatprep.subr.bf16.mxu0 0
      %349 = vmatpush1.bf16.msra.mxu0 %v331
      %350 = vmatprep.subr.bf16.mxu0 0
      %351 = vmatpush1.bf16.msra.mxu0 %v332
      %352 = vmatprep.subr.bf16.mxu0 0
      %353 = vmatpush1.bf16.msra.mxu0 %v333
      %354 = vmatprep.subr.bf16.mxu0 0
      %355 = vmatpush1.bf16.msra.mxu0 %v334
      %356 = vmatprep.subr.bf16.mxu0 0
      %357 = vmatpush1.bf16.msra.mxu0 %v335
      %358 = vmatprep.subr.bf16.mxu0 0
      %359 = vmatpush1.bf16.msra.mxu0 %v336
      %360 = vmatprep.subr.bf16.mxu0 0
      %361 = vmatpush1.bf16.msra.mxu0 %v337
      %362 = vmatprep.subr.bf16.mxu0 0
      %363 = vmatpush1.bf16.msra.mxu0 0
      %364 = vmatprep.subr.bf16.mxu0 0
      %365 = vmatpush1.bf16.msra.mxu0 0
      %366 = vmatprep.subr.bf16.mxu0 0
      %367 = vmatpush1.bf16.msra.mxu0 0
      %368 = vmatprep.subr.bf16.mxu0 0
      %369 = vmatpush1.bf16.msra.mxu0 0
      %370 = vmatprep.subr.bf16.mxu0 0
      %371 = vmatpush1.bf16.msra.mxu0 0
      %372 = vmatprep.subr.bf16.mxu0 0
      %373 = vmatpush1.bf16.msra.mxu0 0
      %374 = vmatprep.subr.bf16.mxu0 0
      %375 = vmatpush1.bf16.msra.mxu0 0
      %376 = vmatprep.subr.bf16.mxu0 0
      %377 = vmatpush1.bf16.msra.mxu0 0
      %378 = vmatprep.mubr.bf16.mxu0 0
      %379 = vmatmul.mubr.bf16.gmra.mrb[0].mxu0 %v278
      %v380 = vpop.f32.mrb[0].mxu0
      %v381 = vadd.f32 %v297, %v380
      %v382 = vpop.f32.mrb[0].mxu0
      %v383 = vpop.f32.mrb[0].mxu0
      %v384 = vadd.f32 %v297, %v383
      %v385 = vpop.f32.mrb[0].mxu0
      %386 = vmatprep.mubr.bf16.mxu0 0
      %387 = vmatmul.mubr.bf16.gmra.mrb[0].mxu0 %v279
      %v388 = vpop.f32.mrb[0].mxu0
      %v389 = vadd.f32 %v297, %v388
      %v390 = vpop.f32.mrb[0].mxu0
      %v391 = vpop.f32.mrb[0].mxu0
      %v392 = vadd.f32 %v297, %v391
      %v393 = vpop.f32.mrb[0].mxu0
      %394 = vmatprep.mubr.bf16.mxu0 0
      %395 = vmatmul.mubr.bf16.gmra.mrb[0].mxu0 %v280
      %v396 = vpop.f32.mrb[0].mxu0
      %v397 = vadd.f32 %v297, %v396
      %v398 = vpop.f32.mrb[0].mxu0
      %v399 = vpop.f32.mrb[0].mxu0
      %v400 = vadd.f32 %v297, %v399
      %v401 = vpop.f32.mrb[0].mxu0
      %402 = vmatprep.mubr.bf16.mxu0 0
      %403 = vmatmul.mubr.bf16.gmra.mrb[0].mxu0 %v281
      %v404 = vpop.f32.mrb[0].mxu0
      %v405 = vadd.f32 %v297, %v404
      %v406 = vpop.f32.mrb[0].mxu0
      %v407 = vpop.f32.mrb[0].mxu0
      %v408 = vadd.f32 %v297, %v407
      %v409 = vpop.f32.mrb[0].mxu0
      %410 = vmatprep.mubr.bf16.mxu0 0
      %411 = vmatmul.mubr.bf16.gmra.mrb[0].mxu0 %v282
      %v412 = vpop.f32.mrb[0].mxu0
      %v413 = vadd.f32 %v297, %v412
      %v414 = vpop.f32.mrb[0].mxu0
      %v415 = vpop.f32.mrb[0].mxu0
      %v416 = vadd.f32 %v297, %v415
      %v417 = vpop.f32.mrb[0].mxu0
      %418 = vmatprep.mubr.bf16.mxu0 0
      %419 = vmatmul.mubr.bf16.gmra.mrb[0].mxu0 %v283
      %v420 = vpop.f32.mrb[0].mxu0
      %v421 = vadd.f32 %v297, %v420
      %v422 = vpop.f32.mrb[0].mxu0
      %v423 = vpop.f32.mrb[0].mxu0
      %v424 = vadd.f32 %v297, %v423
      %v425 = vpop.f32.mrb[0].mxu0
      %426 = vmatprep.mubr.bf16.mxu0 0
      %427 = vmatmul.mubr.bf16.gmra.mrb[0].mxu0 %v284
      %v428 = vpop.f32.mrb[0].mxu0
      %v429 = vadd.f32 %v297, %v428
      %v430 = vpop.f32.mrb[0].mxu0
      %v431 = vpop.f32.mrb[0].mxu0
      %v432 = vadd.f32 %v297, %v431
      %v433 = vpop.f32.mrb[0].mxu0
      %434 = vmatprep.mubr.bf16.mxu0 0
      %435 = vmatmul.mubr.bf16.gmra.mrb[0].mxu0 %v285
      %v436 = vpop.f32.mrb[0].mxu0
      %v437 = vadd.f32 %v297, %v436
      %v438 = vpop.f32.mrb[0].mxu0
      %v439 = vpop.f32.mrb[0].mxu0
      %v440 = vadd.f32 %v297, %v439
      %v441 = vpop.f32.mrb[0].mxu0
      %442 = vmatprep.mubr.bf16.mxu0 0
      %443 = vmatmul.mubr.bf16.gmra.mrb[0].mxu0 %v286
      %v444 = vpop.f32.mrb[0].mxu0
      %v445 = vadd.f32 %v297, %v444
      %v446 = vpop.f32.mrb[0].mxu0
      %v447 = vpop.f32.mrb[0].mxu0
      %v448 = vadd.f32 %v297, %v447
      %v449 = vpop.f32.mrb[0].mxu0
      %450 = vmatprep.mubr.bf16.mxu0 0
      %451 = vmatmul.mubr.bf16.gmra.mrb[0].mxu0 %v287
      %v452 = vpop.f32.mrb[0].mxu0
      %v453 = vadd.f32 %v297, %v452
      %v454 = vpop.f32.mrb[0].mxu0
      %v455 = vpop.f32.mrb[0].mxu0
      %v456 = vadd.f32 %v297, %v455
      %v457 = vpop.f32.mrb[0].mxu0
      %458 = vmatprep.mubr.bf16.mxu0 0
      %459 = vmatmul.mubr.bf16.gmra.mrb[0].mxu0 %v288
      %v460 = vpop.f32.mrb[0].mxu0
      %v461 = vadd.f32 %v297, %v460
      %v462 = vpop.f32.mrb[0].mxu0
      %v463 = vpop.f32.mrb[0].mxu0
      %v464 = vadd.f32 %v297, %v463
      %v465 = vpop.f32.mrb[0].mxu0
      %466 = vmatprep.mubr.bf16.mxu0 0
      %467 = vmatmul.mubr.bf16.gmra.mrb[0].mxu0 %v289
      %v468 = vpop.f32.mrb[0].mxu0
      %v469 = vadd.f32 %v297, %v468
      %v470 = vpop.f32.mrb[0].mxu0
      %v471 = vpop.f32.mrb[0].mxu0
      %v472 = vadd.f32 %v297, %v471
      %v473 = vpop.f32.mrb[0].mxu0
      %474 = vmatprep.mubr.bf16.mxu0 0
      %475 = vmatmul.mubr.bf16.gmra.mrb[0].mxu0 %v290
      %v476 = vpop.f32.mrb[0].mxu0
      %v477 = vadd.f32 %v297, %v476
      %v478 = vpop.f32.mrb[0].mxu0
      %v479 = vpop.f32.mrb[0].mxu0
      %v480 = vadd.f32 %v297, %v479
      %v481 = vpop.f32.mrb[0].mxu0
      %482 = vmatprep.mubr.bf16.mxu0 0
      %483 = vmatmul.mubr.bf16.gmra.mrb[0].mxu0 %v291
      %v484 = vpop.f32.mrb[0].mxu0
      %v485 = vadd.f32 %v297, %v484
      %v486 = vpop.f32.mrb[0].mxu0
      %v487 = vpop.f32.mrb[0].mxu0
      %v488 = vadd.f32 %v297, %v487
      %v489 = vpop.f32.mrb[0].mxu0
      %490 = vmatprep.mubr.bf16.mxu0 0
      %491 = vmatmul.mubr.bf16.gmra.mrb[0].mxu0 %v292
      %v492 = vpop.f32.mrb[0].mxu0
      %v493 = vadd.f32 %v297, %v492
      %v494 = vpop.f32.mrb[0].mxu0
      %v495 = vpop.f32.mrb[0].mxu0
      %v496 = vadd.f32 %v297, %v495
      %v497 = vpop.f32.mrb[0].mxu0
      %498 = vmatprep.mubr.bf16.mxu0 0
      %499 = vmatmul.mubr.bf16.gmra.mrb[0].mxu0 %v293
      %v500 = vpop.f32.mrb[0].mxu0
      %v501 = vadd.f32 %v297, %v500
      %v502 = vpop.f32.mrb[0].mxu0
      %v503 = vpop.f32.mrb[0].mxu0
      %v504 = vadd.f32 %v297, %v503
      %v505 = vpop.f32.mrb[0].mxu0
      %506 = vdwg.mxu0
      %v507 = vmax.f32 %v381, 0.0
      %v508 = vmax.f32 %v384, 0.0
      %v509 = vmax.f32 %v389, 0.0
      %v510 = vmax.f32 %v392, 0.0
      %v511 = vmax.f32 %v397, 0.0
      %v512 = vmax.f32 %v400, 0.0
      %v513 = vmax.f32 %v405, 0.0
      %v514 = vmax.f32 %v408, 0.0
      %v515 = vmax.f32 %v413, 0.0
      %v516 = vmax.f32 %v416, 0.0
      %v517 = vmax.f32 %v421, 0.0
      %v518 = vmax.f32 %v424, 0.0
      %v519 = vmax.f32 %v429, 0.0
      %v520 = vmax.f32 %v432, 0.0
      %v521 = vmax.f32 %v437, 0.0
      %v522 = vmax.f32 %v440, 0.0
      %v523 = vmax.f32 %v445, 0.0
      %v524 = vmax.f32 %v448, 0.0
      %v525 = vmax.f32 %v453, 0.0
      %v526 = vmax.f32 %v456, 0.0
      %v527 = vmax.f32 %v461, 0.0
      %v528 = vmax.f32 %v464, 0.0
      %v529 = vmax.f32 %v469, 0.0
      %v530 = vmax.f32 %v472, 0.0
      %v531 = vmax.f32 %v477, 0.0
      %v532 = vmax.f32 %v480, 0.0
      %v533 = vmax.f32 %v485, 0.0
      %v534 = vmax.f32 %v488, 0.0
      %v535 = vmax.f32 %v493, 0.0
      %v536 = vmax.f32 %v496, 0.0
      %v537 = vmax.f32 %v501, 0.0
      %v538 = vmax.f32 %v504, 0.0
      %v539 = vld [vmem:[%s2] sm:$0xf]
      %v540 = vld [vmem:[%s2 + $0x4] sm:$0xf]
      %v541 = vld [vmem:[%s2 + $0x8] sm:$0xf]
      %v542 = vld [vmem:[%s2 + $0xc] sm:$0xf]
      %v543 = vld [vmem:[%s2 + $0x10] sm:$0xf]
      %v544 = vld [vmem:[%s2 + $0x14] sm:$0xf]
      %v545 = vld [vmem:[%s2 + $0x18] sm:$0xf]
      %v546 = vld [vmem:[%s2 + $0x1c] sm:$0xf]
      %v547 = vld [vmem:[%s2 + $0x20] sm:$0xf]
      %v548 = vld [vmem:[%s2 + $0x24] sm:$0xf]
      %v549 = vld [vmem:[%s2 + $0x28] sm:$0xf]
      %v550 = vld [vmem:[%s2 + $0x2c] sm:$0xf]
      %v551 = vld [vmem:[%s2 + $0x30] sm:$0xf]
      %v552 = vld [vmem:[%s2 + $0x34] sm:$0xf]
      %v553 = vld [vmem:[%s2 + $0x38] sm:$0xf]
      %v554 = vld [vmem:[%s2 + $0x3c] sm:$0xf]
      %v555 = vpack.c.bf16 %v508, %v507
      %v556 = vpack.c.bf16 %v510, %v509
      %v557 = vpack.c.bf16 %v512, %v511
      %v558 = vpack.c.bf16 %v514, %v513
      %v559 = vpack.c.bf16 %v516, %v515
      %v560 = vpack.c.bf16 %v518, %v517
      %v561 = vpack.c.bf16 %v520, %v519
      %v562 = vpack.c.bf16 %v522, %v521
      %v563 = vpack.c.bf16 %v524, %v523
      %v564 = vpack.c.bf16 %v526, %v525
      %v565 = vpack.c.bf16 %v528, %v527
      %v566 = vpack.c.bf16 %v530, %v529
      %v567 = vpack.c.bf16 %v532, %v531
      %v568 = vpack.c.bf16 %v534, %v533
      %v569 = vpack.c.bf16 %v536, %v535
      %v570 = vpack.c.bf16 %v538, %v537
      %v571 = vlaneseq
      %v572 = vshrl.u32 %v571, 7
      %v573 = vsub.s32 1, %v572
      %v574 = vrot.slane %v229, %v573
      %v591 = vunpack.c.l.b16 %v539
      %v592 = vunpack.c.l.b16 %v540
      %v593 = vunpack.c.l.b16 %v541
      %v594 = vunpack.c.l.b16 %v542
      %v595 = vunpack.c.l.b16 %v543
      %v596 = vunpack.c.l.b16 %v544
      %v597 = vunpack.c.l.b16 %v545
      %v598 = vunpack.c.l.b16 %v546
      %v599 = vunpack.c.l.b16 %v547
      %v600 = vunpack.c.l.b16 %v548
      %v601 = vunpack.c.l.b16 %v549
      %v602 = vunpack.c.l.b16 %v550
      %v603 = vunpack.c.l.b16 %v551
      %v604 = vunpack.c.l.b16 %v552
      %v605 = vunpack.c.l.b16 %v553
      %v606 = vunpack.c.l.b16 %v554
      %v607 = vpack.c.b16 %v592, %v591
      %v608 = vpack.c.b16 %v594, %v593
      %v609 = vpack.c.b16 %v596, %v595
      %v610 = vpack.c.b16 %v598, %v597
      %v611 = vpack.c.b16 %v600, %v599
      %v612 = vpack.c.b16 %v602, %v601
      %v613 = vpack.c.b16 %v604, %v603
      %v614 = vpack.c.b16 %v606, %v605
      %623 = vmatprep.subr.bf16.mxu0 0
      %624 = vmatpush1.bf16.msra.mxu0 %v607
      %625 = vmatprep.subr.bf16.mxu0 0
      %626 = vmatpush1.bf16.msra.mxu0 %v608
      %627 = vmatprep.subr.bf16.mxu0 0
      %628 = vmatpush1.bf16.msra.mxu0 %v609
      %629 = vmatprep.subr.bf16.mxu0 0
      %630 = vmatpush1.bf16.msra.mxu0 %v610
      %631 = vmatprep.subr.bf16.mxu0 0
      %632 = vmatpush1.bf16.msra.mxu0 %v611
      %633 = vmatprep.subr.bf16.mxu0 0
      %634 = vmatpush1.bf16.msra.mxu0 %v612
      %635 = vmatprep.subr.bf16.mxu0 0
      %636 = vmatpush1.bf16.msra.mxu0 %v613
      %637 = vmatprep.subr.bf16.mxu0 0
      %638 = vmatpush1.bf16.msra.mxu0 %v614
      %639 = vmatprep.subr.bf16.mxu0 0
      %640 = vmatpush1.bf16.msra.mxu0 0
      %641 = vmatprep.subr.bf16.mxu0 0
      %642 = vmatpush1.bf16.msra.mxu0 0
      %643 = vmatprep.subr.bf16.mxu0 0
      %644 = vmatpush1.bf16.msra.mxu0 0
      %645 = vmatprep.subr.bf16.mxu0 0
      %646 = vmatpush1.bf16.msra.mxu0 0
      %647 = vmatprep.subr.bf16.mxu0 0
      %648 = vmatpush1.bf16.msra.mxu0 0
      %649 = vmatprep.subr.bf16.mxu0 0
      %650 = vmatpush1.bf16.msra.mxu0 0
      %651 = vmatprep.subr.bf16.mxu0 0
      %652 = vmatpush1.bf16.msra.mxu0 0
      %653 = vmatprep.subr.bf16.mxu0 0
      %654 = vmatpush1.bf16.msra.mxu0 0
      %655 = vmatprep.mubr.bf16.mxu0 0
      %656 = vmatmul.mubr.bf16.gmra.mrb[0].mxu0 %v555
      %v657 = vpop.f32.mrb[0].mxu0
      %v658 = vadd.f32 %v574, %v657
      %v659 = vpop.f32.mrb[0].mxu0
      %v660 = vpop.f32.mrb[0].mxu0
      %v661 = vadd.f32 %v574, %v660
      %v662 = vpop.f32.mrb[0].mxu0
      %663 = vmatprep.mubr.bf16.mxu0 0
      %664 = vmatmul.mubr.bf16.gmra.mrb[0].mxu0 %v556
      %v665 = vpop.f32.mrb[0].mxu0
      %v666 = vadd.f32 %v574, %v665
      %v667 = vpop.f32.mrb[0].mxu0
      %v668 = vpop.f32.mrb[0].mxu0
      %v669 = vadd.f32 %v574, %v668
      %v670 = vpop.f32.mrb[0].mxu0
      %671 = vmatprep.mubr.bf16.mxu0 0
      %672 = vmatmul.mubr.bf16.gmra.mrb[0].mxu0 %v557
      %v673 = vpop.f32.mrb[0].mxu0
      %v674 = vadd.f32 %v574, %v673
      %v675 = vpop.f32.mrb[0].mxu0
      %v676 = vpop.f32.mrb[0].mxu0
      %v677 = vadd.f32 %v574, %v676
      %v678 = vpop.f32.mrb[0].mxu0
      %679 = vmatprep.mubr.bf16.mxu0 0
      %680 = vmatmul.mubr.bf16.gmra.mrb[0].mxu0 %v558
      %v681 = vpop.f32.mrb[0].mxu0
      %v682 = vadd.f32 %v574, %v681
      %v683 = vpop.f32.mrb[0].mxu0
      %v684 = vpop.f32.mrb[0].mxu0
      %v685 = vadd.f32 %v574, %v684
      %v686 = vpop.f32.mrb[0].mxu0
      %687 = vmatprep.mubr.bf16.mxu0 0
      %688 = vmatmul.mubr.bf16.gmra.mrb[0].mxu0 %v559
      %v689 = vpop.f32.mrb[0].mxu0
      %v690 = vadd.f32 %v574, %v689
      %v691 = vpop.f32.mrb[0].mxu0
      %v692 = vpop.f32.mrb[0].mxu0
      %v693 = vadd.f32 %v574, %v692
      %v694 = vpop.f32.mrb[0].mxu0
      %695 = vmatprep.mubr.bf16.mxu0 0
      %696 = vmatmul.mubr.bf16.gmra.mrb[0].mxu0 %v560
      %v697 = vpop.f32.mrb[0].mxu0
      %v698 = vadd.f32 %v574, %v697
      %v699 = vpop.f32.mrb[0].mxu0
      %v700 = vpop.f32.mrb[0].mxu0
      %v701 = vadd.f32 %v574, %v700
      %v702 = vpop.f32.mrb[0].mxu0
      %703 = vmatprep.mubr.bf16.mxu0 0
      %704 = vmatmul.mubr.bf16.gmra.mrb[0].mxu0 %v561
      %v705 = vpop.f32.mrb[0].mxu0
      %v706 = vadd.f32 %v574, %v705
      %v707 = vpop.f32.mrb[0].mxu0
      %v708 = vpop.f32.mrb[0].mxu0
      %v709 = vadd.f32 %v574, %v708
      %v710 = vpop.f32.mrb[0].mxu0
      %711 = vmatprep.mubr.bf16.mxu0 0
      %712 = vmatmul.mubr.bf16.gmra.mrb[0].mxu0 %v562
      %v713 = vpop.f32.mrb[0].mxu0
      %v714 = vadd.f32 %v574, %v713
      %v715 = vpop.f32.mrb[0].mxu0
      %v716 = vpop.f32.mrb[0].mxu0
      %v717 = vadd.f32 %v574, %v716
      %v718 = vpop.f32.mrb[0].mxu0
      %719 = vmatprep.mubr.bf16.mxu0 0
      %720 = vmatmul.mubr.bf16.gmra.mrb[0].mxu0 %v563
      %v721 = vpop.f32.mrb[0].mxu0
      %v722 = vadd.f32 %v574, %v721
      %v723 = vpop.f32.mrb[0].mxu0
      %v724 = vpop.f32.mrb[0].mxu0
      %v725 = vadd.f32 %v574, %v724
      %v726 = vpop.f32.mrb[0].mxu0
      %727 = vmatprep.mubr.bf16.mxu0 0
      %728 = vmatmul.mubr.bf16.gmra.mrb[0].mxu0 %v564
      %v729 = vpop.f32.mrb[0].mxu0
      %v730 = vadd.f32 %v574, %v729
      %v731 = vpop.f32.mrb[0].mxu0
      %v732 = vpop.f32.mrb[0].mxu0
      %v733 = vadd.f32 %v574, %v732
      %v734 = vpop.f32.mrb[0].mxu0
      %735 = vmatprep.mubr.bf16.mxu0 0
      %736 = vmatmul.mubr.bf16.gmra.mrb[0].mxu0 %v565
      %v737 = vpop.f32.mrb[0].mxu0
      %v738 = vadd.f32 %v574, %v737
      %v739 = vpop.f32.mrb[0].mxu0
      %v740 = vpop.f32.mrb[0].mxu0
      %v741 = vadd.f32 %v574, %v740
      %v742 = vpop.f32.mrb[0].mxu0
      %743 = vmatprep.mubr.bf16.mxu0 0
      %744 = vmatmul.mubr.bf16.gmra.mrb[0].mxu0 %v566
      %v745 = vpop.f32.mrb[0].mxu0
      %v746 = vadd.f32 %v574, %v745
      %v747 = vpop.f32.mrb[0].mxu0
      %v748 = vpop.f32.mrb[0].mxu0
      %v749 = vadd.f32 %v574, %v748
      %v750 = vpop.f32.mrb[0].mxu0
      %751 = vmatprep.mubr.bf16.mxu0 0
      %752 = vmatmul.mubr.bf16.gmra.mrb[0].mxu0 %v567
      %v753 = vpop.f32.mrb[0].mxu0
      %v754 = vadd.f32 %v574, %v753
      %v755 = vpop.f32.mrb[0].mxu0
      %v756 = vpop.f32.mrb[0].mxu0
      %v757 = vadd.f32 %v574, %v756
      %v758 = vpop.f32.mrb[0].mxu0
      %759 = vmatprep.mubr.bf16.mxu0 0
      %760 = vmatmul.mubr.bf16.gmra.mrb[0].mxu0 %v568
      %v761 = vpop.f32.mrb[0].mxu0
      %v762 = vadd.f32 %v574, %v761
      %v763 = vpop.f32.mrb[0].mxu0
      %v764 = vpop.f32.mrb[0].mxu0
      %v765 = vadd.f32 %v574, %v764
      %v766 = vpop.f32.mrb[0].mxu0
      %767 = vmatprep.mubr.bf16.mxu0 0
      %768 = vmatmul.mubr.bf16.gmra.mrb[0].mxu0 %v569
      %v769 = vpop.f32.mrb[0].mxu0
      %v770 = vadd.f32 %v574, %v769
      %v771 = vpop.f32.mrb[0].mxu0
      %v772 = vpop.f32.mrb[0].mxu0
      %v773 = vadd.f32 %v574, %v772
      %v774 = vpop.f32.mrb[0].mxu0
      %775 = vmatprep.mubr.bf16.mxu0 0
      %776 = vmatmul.mubr.bf16.gmra.mrb[0].mxu0 %v570
      %v777 = vpop.f32.mrb[0].mxu0
      %v778 = vadd.f32 %v574, %v777
      %v779 = vpop.f32.mrb[0].mxu0
      %v780 = vpop.f32.mrb[0].mxu0
      %v781 = vadd.f32 %v574, %v780
      %v782 = vpop.f32.mrb[0].mxu0
      %783 = vdwg.mxu0
      %v784 = vmax.f32 %v658, 0.0
      %v785 = vmax.f32 %v661, 0.0
      %v786 = vmax.f32 %v666, 0.0
      %v787 = vmax.f32 %v669, 0.0
      %v788 = vmax.f32 %v674, 0.0
      %v789 = vmax.f32 %v677, 0.0
      %v790 = vmax.f32 %v682, 0.0
      %v791 = vmax.f32 %v685, 0.0
      %v792 = vmax.f32 %v690, 0.0
      %v793 = vmax.f32 %v693, 0.0
      %v794 = vmax.f32 %v698, 0.0
      %v795 = vmax.f32 %v701, 0.0
      %v796 = vmax.f32 %v706, 0.0
      %v797 = vmax.f32 %v709, 0.0
      %v798 = vmax.f32 %v714, 0.0
      %v799 = vmax.f32 %v717, 0.0
      %v800 = vmax.f32 %v722, 0.0
      %v801 = vmax.f32 %v725, 0.0
      %v802 = vmax.f32 %v730, 0.0
      %v803 = vmax.f32 %v733, 0.0
      %v804 = vmax.f32 %v738, 0.0
      %v805 = vmax.f32 %v741, 0.0
      %v806 = vmax.f32 %v746, 0.0
      %v807 = vmax.f32 %v749, 0.0
      %v808 = vmax.f32 %v754, 0.0
      %v809 = vmax.f32 %v757, 0.0
      %v810 = vmax.f32 %v762, 0.0
      %v811 = vmax.f32 %v765, 0.0
      %v812 = vmax.f32 %v770, 0.0
      %v813 = vmax.f32 %v773, 0.0
      %v814 = vmax.f32 %v778, 0.0
      %v815 = vmax.f32 %v781, 0.0
      %s816 = scalar_lea.vmem %s2, 64
      %v817 = vld [vmem:[%s816] sm:$0xf]
      %v818 = vld [vmem:[%s816 + $0x4] sm:$0xf]
      %v819 = vld [vmem:[%s816 + $0x8] sm:$0xf]
      %v820 = vld [vmem:[%s816 + $0xc] sm:$0xf]
      %v821 = vld [vmem:[%s816 + $0x10] sm:$0xf]
      %v822 = vld [vmem:[%s816 + $0x14] sm:$0xf]
      %v823 = vld [vmem:[%s816 + $0x18] sm:$0xf]
      %v824 = vld [vmem:[%s816 + $0x1c] sm:$0xf]
      %v825 = vld [vmem:[%s816 + $0x20] sm:$0xf]
      %v826 = vld [vmem:[%s816 + $0x24] sm:$0xf]
      %v827 = vld [vmem:[%s816 + $0x28] sm:$0xf]
      %v828 = vld [vmem:[%s816 + $0x2c] sm:$0xf]
      %v829 = vld [vmem:[%s816 + $0x30] sm:$0xf]
      %v830 = vld [vmem:[%s816 + $0x34] sm:$0xf]
      %v831 = vld [vmem:[%s816 + $0x38] sm:$0xf]
      %v832 = vld [vmem:[%s816 + $0x3c] sm:$0xf]
      %v833 = vpack.c.bf16 %v785, %v784
      %v834 = vpack.c.bf16 %v787, %v786
      %v835 = vpack.c.bf16 %v789, %v788
      %v836 = vpack.c.bf16 %v791, %v790
      %v837 = vpack.c.bf16 %v793, %v792
      %v838 = vpack.c.bf16 %v795, %v794
      %v839 = vpack.c.bf16 %v797, %v796
      %v840 = vpack.c.bf16 %v799, %v798
      %v841 = vpack.c.bf16 %v801, %v800
      %v842 = vpack.c.bf16 %v803, %v802
      %v843 = vpack.c.bf16 %v805, %v804
      %v844 = vpack.c.bf16 %v807, %v806
      %v845 = vpack.c.bf16 %v809, %v808
      %v846 = vpack.c.bf16 %v811, %v810
      %v847 = vpack.c.bf16 %v813, %v812
      %v848 = vpack.c.bf16 %v815, %v814
      %v849 = vlaneseq
      %v850 = vshrl.u32 %v849, 7
      %v851 = vsub.s32 2, %v850
      %v852 = vrot.slane %v229, %v851
      %v869 = vunpack.c.l.b16 %v817
      %v870 = vunpack.c.l.b16 %v818
      %v871 = vunpack.c.l.b16 %v819
      %v872 = vunpack.c.l.b16 %v820
      %v873 = vunpack.c.l.b16 %v821
      %v874 = vunpack.c.l.b16 %v822
      %v875 = vunpack.c.l.b16 %v823
      %v876 = vunpack.c.l.b16 %v824
      %v877 = vunpack.c.l.b16 %v825
      %v878 = vunpack.c.l.b16 %v826
      %v879 = vunpack.c.l.b16 %v827
      %v880 = vunpack.c.l.b16 %v828
      %v881 = vunpack.c.l.b16 %v829
      %v882 = vunpack.c.l.b16 %v830
      %v883 = vunpack.c.l.b16 %v831
      %v884 = vunpack.c.l.b16 %v832
      %v885 = vpack.c.b16 %v870, %v869
      %v886 = vpack.c.b16 %v872, %v871
      %v887 = vpack.c.b16 %v874, %v873
      %v888 = vpack.c.b16 %v876, %v875
      %v889 = vpack.c.b16 %v878, %v877
      %v890 = vpack.c.b16 %v880, %v879
      %v891 = vpack.c.b16 %v882, %v881
      %v892 = vpack.c.b16 %v884, %v883
      %901 = vmatprep.subr.bf16.mxu0 0
      %902 = vmatpush1.bf16.msra.mxu0 %v885
      %903 = vmatprep.subr.bf16.mxu0 0
      %904 = vmatpush1.bf16.msra.mxu0 %v886
      %905 = vmatprep.subr.bf16.mxu0 0
      %906 = vmatpush1.bf16.msra.mxu0 %v887
      %907 = vmatprep.subr.bf16.mxu0 0
      %908 = vmatpush1.bf16.msra.mxu0 %v888
      %909 = vmatprep.subr.bf16.mxu0 0
      %910 = vmatpush1.bf16.msra.mxu0 %v889
      %911 = vmatprep.subr.bf16.mxu0 0
      %912 = vmatpush1.bf16.msra.mxu0 %v890
      %913 = vmatprep.subr.bf16.mxu0 0
      %914 = vmatpush1.bf16.msra.mxu0 %v891
      %915 = vmatprep.subr.bf16.mxu0 0
      %916 = vmatpush1.bf16.msra.mxu0 %v892
      %917 = vmatprep.subr.bf16.mxu0 0
      %918 = vmatpush1.bf16.msra.mxu0 0
      %919 = vmatprep.subr.bf16.mxu0 0
      %920 = vmatpush1.bf16.msra.mxu0 0
      %921 = vmatprep.subr.bf16.mxu0 0
      %922 = vmatpush1.bf16.msra.mxu0 0
      %923 = vmatprep.subr.bf16.mxu0 0
      %924 = vmatpush1.bf16.msra.mxu0 0
      %925 = vmatprep.subr.bf16.mxu0 0
      %926 = vmatpush1.bf16.msra.mxu0 0
      %927 = vmatprep.subr.bf16.mxu0 0
      %928 = vmatpush1.bf16.msra.mxu0 0
      %929 = vmatprep.subr.bf16.mxu0 0
      %930 = vmatpush1.bf16.msra.mxu0 0
      %931 = vmatprep.subr.bf16.mxu0 0
      %932 = vmatpush1.bf16.msra.mxu0 0
      %933 = vmatprep.mubr.bf16.mxu0 0
      %934 = vmatmul.mubr.bf16.gmra.mrb[0].mxu0 %v833
      %v935 = vpop.f32.mrb[0].mxu0
      %v936 = vadd.f32 %v852, %v935
      %v937 = vpop.f32.mrb[0].mxu0
      %v938 = vpop.f32.mrb[0].mxu0
      %v939 = vadd.f32 %v852, %v938
      %v940 = vpop.f32.mrb[0].mxu0
      %941 = vmatprep.mubr.bf16.mxu0 0
      %942 = vmatmul.mubr.bf16.gmra.mrb[0].mxu0 %v834
      %v943 = vpop.f32.mrb[0].mxu0
      %v944 = vadd.f32 %v852, %v943
      %v945 = vpop.f32.mrb[0].mxu0
      %v946 = vpop.f32.mrb[0].mxu0
      %v947 = vadd.f32 %v852, %v946
      %v948 = vpop.f32.mrb[0].mxu0
      %949 = vmatprep.mubr.bf16.mxu0 0
      %950 = vmatmul.mubr.bf16.gmra.mrb[0].mxu0 %v835
      %v951 = vpop.f32.mrb[0].mxu0
      %v952 = vadd.f32 %v852, %v951
      %v953 = vpop.f32.mrb[0].mxu0
      %v954 = vpop.f32.mrb[0].mxu0
      %v955 = vadd.f32 %v852, %v954
      %v956 = vpop.f32.mrb[0].mxu0
      %957 = vmatprep.mubr.bf16.mxu0 0
      %958 = vmatmul.mubr.bf16.gmra.mrb[0].mxu0 %v836
      %v959 = vpop.f32.mrb[0].mxu0
      %v960 = vadd.f32 %v852, %v959
      %v961 = vpop.f32.mrb[0].mxu0
      %v962 = vpop.f32.mrb[0].mxu0
      %v963 = vadd.f32 %v852, %v962
      %v964 = vpop.f32.mrb[0].mxu0
      %965 = vmatprep.mubr.bf16.mxu0 0
      %966 = vmatmul.mubr.bf16.gmra.mrb[0].mxu0 %v837
      %v967 = vpop.f32.mrb[0].mxu0
      %v968 = vadd.f32 %v852, %v967
      %v969 = vpop.f32.mrb[0].mxu0
      %v970 = vpop.f32.mrb[0].mxu0
      %v971 = vadd.f32 %v852, %v970
      %v972 = vpop.f32.mrb[0].mxu0
      %973 = vmatprep.mubr.bf16.mxu0 0
      %974 = vmatmul.mubr.bf16.gmra.mrb[0].mxu0 %v838
      %v975 = vpop.f32.mrb[0].mxu0
      %v976 = vadd.f32 %v852, %v975
      %v977 = vpop.f32.mrb[0].mxu0
      %v978 = vpop.f32.mrb[0].mxu0
      %v979 = vadd.f32 %v852, %v978
      %v980 = vpop.f32.mrb[0].mxu0
      %981 = vmatprep.mubr.bf16.mxu0 0
      %982 = vmatmul.mubr.bf16.gmra.mrb[0].mxu0 %v839
      %v983 = vpop.f32.mrb[0].mxu0
      %v984 = vadd.f32 %v852, %v983
      %v985 = vpop.f32.mrb[0].mxu0
      %v986 = vpop.f32.mrb[0].mxu0
      %v987 = vadd.f32 %v852, %v986
      %v988 = vpop.f32.mrb[0].mxu0
      %989 = vmatprep.mubr.bf16.mxu0 0
      %990 = vmatmul.mubr.bf16.gmra.mrb[0].mxu0 %v840
      %v991 = vpop.f32.mrb[0].mxu0
      %v992 = vadd.f32 %v852, %v991
      %v993 = vpop.f32.mrb[0].mxu0
      %v994 = vpop.f32.mrb[0].mxu0
      %v995 = vadd.f32 %v852, %v994
      %v996 = vpop.f32.mrb[0].mxu0
      %997 = vmatprep.mubr.bf16.mxu0 0
      %998 = vmatmul.mubr.bf16.gmra.mrb[0].mxu0 %v841
      %v999 = vpop.f32.mrb[0].mxu0
      %v1000 = vadd.f32 %v852, %v999
      %v1001 = vpop.f32.mrb[0].mxu0
      %v1002 = vpop.f32.mrb[0].mxu0
      %v1003 = vadd.f32 %v852, %v1002
      %v1004 = vpop.f32.mrb[0].mxu0
      %1005 = vmatprep.mubr.bf16.mxu0 0
      %1006 = vmatmul.mubr.bf16.gmra.mrb[0].mxu0 %v842
      %v1007 = vpop.f32.mrb[0].mxu0
      %v1008 = vadd.f32 %v852, %v1007
      %v1009 = vpop.f32.mrb[0].mxu0
      %v1010 = vpop.f32.mrb[0].mxu0
      %v1011 = vadd.f32 %v852, %v1010
      %v1012 = vpop.f32.mrb[0].mxu0
      %1013 = vmatprep.mubr.bf16.mxu0 0
      %1014 = vmatmul.mubr.bf16.gmra.mrb[0].mxu0 %v843
      %v1015 = vpop.f32.mrb[0].mxu0
      %v1016 = vadd.f32 %v852, %v1015
      %v1017 = vpop.f32.mrb[0].mxu0
      %v1018 = vpop.f32.mrb[0].mxu0
      %v1019 = vadd.f32 %v852, %v1018
      %v1020 = vpop.f32.mrb[0].mxu0
      %1021 = vmatprep.mubr.bf16.mxu0 0
      %1022 = vmatmul.mubr.bf16.gmra.mrb[0].mxu0 %v844
      %v1023 = vpop.f32.mrb[0].mxu0
      %v1024 = vadd.f32 %v852, %v1023
      %v1025 = vpop.f32.mrb[0].mxu0
      %v1026 = vpop.f32.mrb[0].mxu0
      %v1027 = vadd.f32 %v852, %v1026
      %v1028 = vpop.f32.mrb[0].mxu0
      %1029 = vmatprep.mubr.bf16.mxu0 0
      %1030 = vmatmul.mubr.bf16.gmra.mrb[0].mxu0 %v845
      %v1031 = vpop.f32.mrb[0].mxu0
      %v1032 = vadd.f32 %v852, %v1031
      %v1033 = vpop.f32.mrb[0].mxu0
      %v1034 = vpop.f32.mrb[0].mxu0
      %v1035 = vadd.f32 %v852, %v1034
      %v1036 = vpop.f32.mrb[0].mxu0
      %1037 = vmatprep.mubr.bf16.mxu0 0
      %1038 = vmatmul.mubr.bf16.gmra.mrb[0].mxu0 %v846
      %v1039 = vpop.f32.mrb[0].mxu0
      %v1040 = vadd.f32 %v852, %v1039
      %v1041 = vpop.f32.mrb[0].mxu0
      %v1042 = vpop.f32.mrb[0].mxu0
      %v1043 = vadd.f32 %v852, %v1042
      %v1044 = vpop.f32.mrb[0].mxu0
      %1045 = vmatprep.mubr.bf16.mxu0 0
      %1046 = vmatmul.mubr.bf16.gmra.mrb[0].mxu0 %v847
      %v1047 = vpop.f32.mrb[0].mxu0
      %v1048 = vadd.f32 %v852, %v1047
      %v1049 = vpop.f32.mrb[0].mxu0
      %v1050 = vpop.f32.mrb[0].mxu0
      %v1051 = vadd.f32 %v852, %v1050
      %v1052 = vpop.f32.mrb[0].mxu0
      %1053 = vmatprep.mubr.bf16.mxu0 0
      %1054 = vmatmul.mubr.bf16.gmra.mrb[0].mxu0 %v848
      %v1055 = vpop.f32.mrb[0].mxu0
      %v1056 = vadd.f32 %v852, %v1055
      %v1057 = vpop.f32.mrb[0].mxu0
      %v1058 = vpop.f32.mrb[0].mxu0
      %v1059 = vadd.f32 %v852, %v1058
      %v1060 = vpop.f32.mrb[0].mxu0
      %1061 = vdwg.mxu0
      %v1062 = vadd.f32 %v507, %v936
      %v1063 = vadd.f32 %v508, %v939
      %v1064 = vadd.f32 %v509, %v944
      %v1065 = vadd.f32 %v510, %v947
      %v1066 = vadd.f32 %v511, %v952
      %v1067 = vadd.f32 %v512, %v955
      %v1068 = vadd.f32 %v513, %v960
      %v1069 = vadd.f32 %v514, %v963
      %v1070 = vadd.f32 %v515, %v968
      %v1071 = vadd.f32 %v516, %v971
      %v1072 = vadd.f32 %v517, %v976
      %v1073 = vadd.f32 %v518, %v979
      %v1074 = vadd.f32 %v519, %v984
      %v1075 = vadd.f32 %v520, %v987
      %v1076 = vadd.f32 %v521, %v992
      %v1077 = vadd.f32 %v522, %v995
      %v1078 = vadd.f32 %v523, %v1000
      %v1079 = vadd.f32 %v524, %v1003
      %v1080 = vadd.f32 %v525, %v1008
      %v1081 = vadd.f32 %v526, %v1011
      %v1082 = vadd.f32 %v527, %v1016
      %v1083 = vadd.f32 %v528, %v1019
      %v1084 = vadd.f32 %v529, %v1024
      %v1085 = vadd.f32 %v530, %v1027
      %v1086 = vadd.f32 %v531, %v1032
      %v1087 = vadd.f32 %v532, %v1035
      %v1088 = vadd.f32 %v533, %v1040
      %v1089 = vadd.f32 %v534, %v1043
      %v1090 = vadd.f32 %v535, %v1048
      %v1091 = vadd.f32 %v536, %v1051
      %v1092 = vadd.f32 %v537, %v1056
      %v1093 = vadd.f32 %v538, %v1059
      %v1094 = vmax.f32 %v1062, 0.0
      %v1095 = vmax.f32 %v1063, 0.0
      %v1096 = vmax.f32 %v1064, 0.0
      %v1097 = vmax.f32 %v1065, 0.0
      %v1098 = vmax.f32 %v1066, 0.0
      %v1099 = vmax.f32 %v1067, 0.0
      %v1100 = vmax.f32 %v1068, 0.0
      %v1101 = vmax.f32 %v1069, 0.0
      %v1102 = vmax.f32 %v1070, 0.0
      %v1103 = vmax.f32 %v1071, 0.0
      %v1104 = vmax.f32 %v1072, 0.0
      %v1105 = vmax.f32 %v1073, 0.0
      %v1106 = vmax.f32 %v1074, 0.0
      %v1107 = vmax.f32 %v1075, 0.0
      %v1108 = vmax.f32 %v1076, 0.0
      %v1109 = vmax.f32 %v1077, 0.0
      %v1110 = vmax.f32 %v1078, 0.0
      %v1111 = vmax.f32 %v1079, 0.0
      %v1112 = vmax.f32 %v1080, 0.0
      %v1113 = vmax.f32 %v1081, 0.0
      %v1114 = vmax.f32 %v1082, 0.0
      %v1115 = vmax.f32 %v1083, 0.0
      %v1116 = vmax.f32 %v1084, 0.0
      %v1117 = vmax.f32 %v1085, 0.0
      %v1118 = vmax.f32 %v1086, 0.0
      %v1119 = vmax.f32 %v1087, 0.0
      %v1120 = vmax.f32 %v1088, 0.0
      %v1121 = vmax.f32 %v1089, 0.0
      %v1122 = vmax.f32 %v1090, 0.0
      %v1123 = vmax.f32 %v1091, 0.0
      %v1124 = vmax.f32 %v1092, 0.0
      %v1125 = vmax.f32 %v1093, 0.0
      %s1126 = scalar_lea.vmem %s2, 128
      %v1127 = vld [vmem:[%s1126] sm:$0xf]
      %v1128 = vld [vmem:[%s1126 + $0x4] sm:$0xf]
      %v1129 = vld [vmem:[%s1126 + $0x8] sm:$0xf]
      %v1130 = vld [vmem:[%s1126 + $0xc] sm:$0xf]
      %v1131 = vld [vmem:[%s1126 + $0x10] sm:$0xf]
      %v1132 = vld [vmem:[%s1126 + $0x14] sm:$0xf]
      %v1133 = vld [vmem:[%s1126 + $0x18] sm:$0xf]
      %v1134 = vld [vmem:[%s1126 + $0x1c] sm:$0xf]
      %v1135 = vld [vmem:[%s1126 + $0x20] sm:$0xf]
      %v1136 = vld [vmem:[%s1126 + $0x24] sm:$0xf]
      %v1137 = vld [vmem:[%s1126 + $0x28] sm:$0xf]
      %v1138 = vld [vmem:[%s1126 + $0x2c] sm:$0xf]
      %v1139 = vld [vmem:[%s1126 + $0x30] sm:$0xf]
      %v1140 = vld [vmem:[%s1126 + $0x34] sm:$0xf]
      %v1141 = vld [vmem:[%s1126 + $0x38] sm:$0xf]
      %v1142 = vld [vmem:[%s1126 + $0x3c] sm:$0xf]
      %v1143 = vpack.c.bf16 %v1095, %v1094
      %v1144 = vpack.c.bf16 %v1097, %v1096
      %v1145 = vpack.c.bf16 %v1099, %v1098
      %v1146 = vpack.c.bf16 %v1101, %v1100
      %v1147 = vpack.c.bf16 %v1103, %v1102
      %v1148 = vpack.c.bf16 %v1105, %v1104
      %v1149 = vpack.c.bf16 %v1107, %v1106
      %v1150 = vpack.c.bf16 %v1109, %v1108
      %v1151 = vpack.c.bf16 %v1111, %v1110
      %v1152 = vpack.c.bf16 %v1113, %v1112
      %v1153 = vpack.c.bf16 %v1115, %v1114
      %v1154 = vpack.c.bf16 %v1117, %v1116
      %v1155 = vpack.c.bf16 %v1119, %v1118
      %v1156 = vpack.c.bf16 %v1121, %v1120
      %v1157 = vpack.c.bf16 %v1123, %v1122
      %v1158 = vpack.c.bf16 %v1125, %v1124
      %v1159 = vlaneseq
      %v1160 = vshrl.u32 %v1159, 7
      %v1161 = vsub.s32 3, %v1160
      %v1162 = vrot.slane %v229, %v1161
      %v1179 = vunpack.c.l.b16 %v1127
      %v1180 = vunpack.c.l.b16 %v1128
      %v1181 = vunpack.c.l.b16 %v1129
      %v1182 = vunpack.c.l.b16 %v1130
      %v1183 = vunpack.c.l.b16 %v1131
      %v1184 = vunpack.c.l.b16 %v1132
      %v1185 = vunpack.c.l.b16 %v1133
      %v1186 = vunpack.c.l.b16 %v1134
      %v1187 = vunpack.c.l.b16 %v1135
      %v1188 = vunpack.c.l.b16 %v1136
      %v1189 = vunpack.c.l.b16 %v1137
      %v1190 = vunpack.c.l.b16 %v1138
      %v1191 = vunpack.c.l.b16 %v1139
      %v1192 = vunpack.c.l.b16 %v1140
      %v1193 = vunpack.c.l.b16 %v1141
      %v1194 = vunpack.c.l.b16 %v1142
      %v1195 = vpack.c.b16 %v1180, %v1179
      %v1196 = vpack.c.b16 %v1182, %v1181
      %v1197 = vpack.c.b16 %v1184, %v1183
      %v1198 = vpack.c.b16 %v1186, %v1185
      %v1199 = vpack.c.b16 %v1188, %v1187
      %v1200 = vpack.c.b16 %v1190, %v1189
      %v1201 = vpack.c.b16 %v1192, %v1191
      %v1202 = vpack.c.b16 %v1194, %v1193
      %1211 = vmatprep.subr.bf16.mxu0 0
      %1212 = vmatpush1.bf16.msra.mxu0 %v1195
      %1213 = vmatprep.subr.bf16.mxu0 0
      %1214 = vmatpush1.bf16.msra.mxu0 %v1196
      %1215 = vmatprep.subr.bf16.mxu0 0
      %1216 = vmatpush1.bf16.msra.mxu0 %v1197
      %1217 = vmatprep.subr.bf16.mxu0 0
      %1218 = vmatpush1.bf16.msra.mxu0 %v1198
      %1219 = vmatprep.subr.bf16.mxu0 0
      %1220 = vmatpush1.bf16.msra.mxu0 %v1199
      %1221 = vmatprep.subr.bf16.mxu0 0
      %1222 = vmatpush1.bf16.msra.mxu0 %v1200
      %1223 = vmatprep.subr.bf16.mxu0 0
      %1224 = vmatpush1.bf16.msra.mxu0 %v1201
      %1225 = vmatprep.subr.bf16.mxu0 0
      %1226 = vmatpush1.bf16.msra.mxu0 %v1202
      %1227 = vmatprep.subr.bf16.mxu0 0
      %1228 = vmatpush1.bf16.msra.mxu0 0
      %1229 = vmatprep.subr.bf16.mxu0 0
      %1230 = vmatpush1.bf16.msra.mxu0 0
      %1231 = vmatprep.subr.bf16.mxu0 0
      %1232 = vmatpush1.bf16.msra.mxu0 0
      %1233 = vmatprep.subr.bf16.mxu0 0
      %1234 = vmatpush1.bf16.msra.mxu0 0
      %1235 = vmatprep.subr.bf16.mxu0 0
      %1236 = vmatpush1.bf16.msra.mxu0 0
      %1237 = vmatprep.subr.bf16.mxu0 0
      %1238 = vmatpush1.bf16.msra.mxu0 0
      %1239 = vmatprep.subr.bf16.mxu0 0
      %1240 = vmatpush1.bf16.msra.mxu0 0
      %1241 = vmatprep.subr.bf16.mxu0 0
      %1242 = vmatpush1.bf16.msra.mxu0 0
      %1243 = vmatprep.mubr.bf16.mxu0 0
      %1244 = vmatmul.mubr.bf16.gmra.mrb[0].mxu0 %v1143
      %v1245 = vpop.f32.mrb[0].mxu0
      %v1246 = vadd.f32 %v1162, %v1245
      %v1247 = vpop.f32.mrb[0].mxu0
      %v1248 = vpop.f32.mrb[0].mxu0
      %v1249 = vadd.f32 %v1162, %v1248
      %v1250 = vpop.f32.mrb[0].mxu0
      %1251 = vmatprep.mubr.bf16.mxu0 0
      %1252 = vmatmul.mubr.bf16.gmra.mrb[0].mxu0 %v1144
      %v1253 = vpop.f32.mrb[0].mxu0
      %v1254 = vadd.f32 %v1162, %v1253
      %v1255 = vpop.f32.mrb[0].mxu0
      %v1256 = vpop.f32.mrb[0].mxu0
      %v1257 = vadd.f32 %v1162, %v1256
      %v1258 = vpop.f32.mrb[0].mxu0
      %1259 = vmatprep.mubr.bf16.mxu0 0
      %1260 = vmatmul.mubr.bf16.gmra.mrb[0].mxu0 %v1145
      %v1261 = vpop.f32.mrb[0].mxu0
      %v1262 = vadd.f32 %v1162, %v1261
      %v1263 = vpop.f32.mrb[0].mxu0
      %v1264 = vpop.f32.mrb[0].mxu0
      %v1265 = vadd.f32 %v1162, %v1264
      %v1266 = vpop.f32.mrb[0].mxu0
      %1267 = vmatprep.mubr.bf16.mxu0 0
      %1268 = vmatmul.mubr.bf16.gmra.mrb[0].mxu0 %v1146
      %v1269 = vpop.f32.mrb[0].mxu0
      %v1270 = vadd.f32 %v1162, %v1269
      %v1271 = vpop.f32.mrb[0].mxu0
      %v1272 = vpop.f32.mrb[0].mxu0
      %v1273 = vadd.f32 %v1162, %v1272
      %v1274 = vpop.f32.mrb[0].mxu0
      %1275 = vmatprep.mubr.bf16.mxu0 0
      %1276 = vmatmul.mubr.bf16.gmra.mrb[0].mxu0 %v1147
      %v1277 = vpop.f32.mrb[0].mxu0
      %v1278 = vadd.f32 %v1162, %v1277
      %v1279 = vpop.f32.mrb[0].mxu0
      %v1280 = vpop.f32.mrb[0].mxu0
      %v1281 = vadd.f32 %v1162, %v1280
      %v1282 = vpop.f32.mrb[0].mxu0
      %1283 = vmatprep.mubr.bf16.mxu0 0
      %1284 = vmatmul.mubr.bf16.gmra.mrb[0].mxu0 %v1148
      %v1285 = vpop.f32.mrb[0].mxu0
      %v1286 = vadd.f32 %v1162, %v1285
      %v1287 = vpop.f32.mrb[0].mxu0
      %v1288 = vpop.f32.mrb[0].mxu0
      %v1289 = vadd.f32 %v1162, %v1288
      %v1290 = vpop.f32.mrb[0].mxu0
      %1291 = vmatprep.mubr.bf16.mxu0 0
      %1292 = vmatmul.mubr.bf16.gmra.mrb[0].mxu0 %v1149
      %v1293 = vpop.f32.mrb[0].mxu0
      %v1294 = vadd.f32 %v1162, %v1293
      %v1295 = vpop.f32.mrb[0].mxu0
      %v1296 = vpop.f32.mrb[0].mxu0
      %v1297 = vadd.f32 %v1162, %v1296
      %v1298 = vpop.f32.mrb[0].mxu0
      %1299 = vmatprep.mubr.bf16.mxu0 0
      %1300 = vmatmul.mubr.bf16.gmra.mrb[0].mxu0 %v1150
      %v1301 = vpop.f32.mrb[0].mxu0
      %v1302 = vadd.f32 %v1162, %v1301
      %v1303 = vpop.f32.mrb[0].mxu0
      %v1304 = vpop.f32.mrb[0].mxu0
      %v1305 = vadd.f32 %v1162, %v1304
      %v1306 = vpop.f32.mrb[0].mxu0
      %1307 = vmatprep.mubr.bf16.mxu0 0
      %1308 = vmatmul.mubr.bf16.gmra.mrb[0].mxu0 %v1151
      %v1309 = vpop.f32.mrb[0].mxu0
      %v1310 = vadd.f32 %v1162, %v1309
      %v1311 = vpop.f32.mrb[0].mxu0
      %v1312 = vpop.f32.mrb[0].mxu0
      %v1313 = vadd.f32 %v1162, %v1312
      %v1314 = vpop.f32.mrb[0].mxu0
      %1315 = vmatprep.mubr.bf16.mxu0 0
      %1316 = vmatmul.mubr.bf16.gmra.mrb[0].mxu0 %v1152
      %v1317 = vpop.f32.mrb[0].mxu0
      %v1318 = vadd.f32 %v1162, %v1317
      %v1319 = vpop.f32.mrb[0].mxu0
      %v1320 = vpop.f32.mrb[0].mxu0
      %v1321 = vadd.f32 %v1162, %v1320
      %v1322 = vpop.f32.mrb[0].mxu0
      %1323 = vmatprep.mubr.bf16.mxu0 0
      %1324 = vmatmul.mubr.bf16.gmra.mrb[0].mxu0 %v1153
      %v1325 = vpop.f32.mrb[0].mxu0
      %v1326 = vadd.f32 %v1162, %v1325
      %v1327 = vpop.f32.mrb[0].mxu0
      %v1328 = vpop.f32.mrb[0].mxu0
      %v1329 = vadd.f32 %v1162, %v1328
      %v1330 = vpop.f32.mrb[0].mxu0
      %1331 = vmatprep.mubr.bf16.mxu0 0
      %1332 = vmatmul.mubr.bf16.gmra.mrb[0].mxu0 %v1154
      %v1333 = vpop.f32.mrb[0].mxu0
      %v1334 = vadd.f32 %v1162, %v1333
      %v1335 = vpop.f32.mrb[0].mxu0
      %v1336 = vpop.f32.mrb[0].mxu0
      %v1337 = vadd.f32 %v1162, %v1336
      %v1338 = vpop.f32.mrb[0].mxu0
      %1339 = vmatprep.mubr.bf16.mxu0 0
      %1340 = vmatmul.mubr.bf16.gmra.mrb[0].mxu0 %v1155
      %v1341 = vpop.f32.mrb[0].mxu0
      %v1342 = vadd.f32 %v1162, %v1341
      %v1343 = vpop.f32.mrb[0].mxu0
      %v1344 = vpop.f32.mrb[0].mxu0
      %v1345 = vadd.f32 %v1162, %v1344
      %v1346 = vpop.f32.mrb[0].mxu0
      %1347 = vmatprep.mubr.bf16.mxu0 0
      %1348 = vmatmul.mubr.bf16.gmra.mrb[0].mxu0 %v1156
      %v1349 = vpop.f32.mrb[0].mxu0
      %v1350 = vadd.f32 %v1162, %v1349
      %v1351 = vpop.f32.mrb[0].mxu0
      %v1352 = vpop.f32.mrb[0].mxu0
      %v1353 = vadd.f32 %v1162, %v1352
      %v1354 = vpop.f32.mrb[0].mxu0
      %1355 = vmatprep.mubr.bf16.mxu0 0
      %1356 = vmatmul.mubr.bf16.gmra.mrb[0].mxu0 %v1157
      %v1357 = vpop.f32.mrb[0].mxu0
      %v1358 = vadd.f32 %v1162, %v1357
      %v1359 = vpop.f32.mrb[0].mxu0
      %v1360 = vpop.f32.mrb[0].mxu0
      %v1361 = vadd.f32 %v1162, %v1360
      %v1362 = vpop.f32.mrb[0].mxu0
      %1363 = vmatprep.mubr.bf16.mxu0 0
      %1364 = vmatmul.mubr.bf16.gmra.mrb[0].mxu0 %v1158
      %v1365 = vpop.f32.mrb[0].mxu0
      %v1366 = vadd.f32 %v1162, %v1365
      %v1367 = vpop.f32.mrb[0].mxu0
      %v1368 = vpop.f32.mrb[0].mxu0
      %v1369 = vadd.f32 %v1162, %v1368
      %v1370 = vpop.f32.mrb[0].mxu0
      %1371 = vdwg.mxu0
      %v1372 = vmax.f32 %v1246, 0.0
      %v1373 = vmax.f32 %v1249, 0.0
      %v1374 = vmax.f32 %v1254, 0.0
      %v1375 = vmax.f32 %v1257, 0.0
      %v1376 = vmax.f32 %v1262, 0.0
      %v1377 = vmax.f32 %v1265, 0.0
      %v1378 = vmax.f32 %v1270, 0.0
      %v1379 = vmax.f32 %v1273, 0.0
      %v1380 = vmax.f32 %v1278, 0.0
      %v1381 = vmax.f32 %v1281, 0.0
      %v1382 = vmax.f32 %v1286, 0.0
      %v1383 = vmax.f32 %v1289, 0.0
      %v1384 = vmax.f32 %v1294, 0.0
      %v1385 = vmax.f32 %v1297, 0.0
      %v1386 = vmax.f32 %v1302, 0.0
      %v1387 = vmax.f32 %v1305, 0.0
      %v1388 = vmax.f32 %v1310, 0.0
      %v1389 = vmax.f32 %v1313, 0.0
      %v1390 = vmax.f32 %v1318, 0.0
      %v1391 = vmax.f32 %v1321, 0.0
      %v1392 = vmax.f32 %v1326, 0.0
      %v1393 = vmax.f32 %v1329, 0.0
      %v1394 = vmax.f32 %v1334, 0.0
      %v1395 = vmax.f32 %v1337, 0.0
      %v1396 = vmax.f32 %v1342, 0.0
      %v1397 = vmax.f32 %v1345, 0.0
      %v1398 = vmax.f32 %v1350, 0.0
      %v1399 = vmax.f32 %v1353, 0.0
      %v1400 = vmax.f32 %v1358, 0.0
      %v1401 = vmax.f32 %v1361, 0.0
      %v1402 = vmax.f32 %v1366, 0.0
      %v1403 = vmax.f32 %v1369, 0.0
      %s1404 = scalar_lea.vmem %s2, 192
      %v1405 = vld [vmem:[%s1404] sm:$0xf]
      %v1406 = vld [vmem:[%s1404 + $0x4] sm:$0xf]
      %v1407 = vld [vmem:[%s1404 + $0x8] sm:$0xf]
      %v1408 = vld [vmem:[%s1404 + $0xc] sm:$0xf]
      %v1409 = vld [vmem:[%s1404 + $0x10] sm:$0xf]
      %v1410 = vld [vmem:[%s1404 + $0x14] sm:$0xf]
      %v1411 = vld [vmem:[%s1404 + $0x18] sm:$0xf]
      %v1412 = vld [vmem:[%s1404 + $0x1c] sm:$0xf]
      %v1413 = vld [vmem:[%s1404 + $0x20] sm:$0xf]
      %v1414 = vld [vmem:[%s1404 + $0x24] sm:$0xf]
      %v1415 = vld [vmem:[%s1404 + $0x28] sm:$0xf]
      %v1416 = vld [vmem:[%s1404 + $0x2c] sm:$0xf]
      %v1417 = vld [vmem:[%s1404 + $0x30] sm:$0xf]
      %v1418 = vld [vmem:[%s1404 + $0x34] sm:$0xf]
      %v1419 = vld [vmem:[%s1404 + $0x38] sm:$0xf]
      %v1420 = vld [vmem:[%s1404 + $0x3c] sm:$0xf]
      %v1421 = vpack.c.bf16 %v1373, %v1372
      %v1422 = vpack.c.bf16 %v1375, %v1374
      %v1423 = vpack.c.bf16 %v1377, %v1376
      %v1424 = vpack.c.bf16 %v1379, %v1378
      %v1425 = vpack.c.bf16 %v1381, %v1380
      %v1426 = vpack.c.bf16 %v1383, %v1382
      %v1427 = vpack.c.bf16 %v1385, %v1384
      %v1428 = vpack.c.bf16 %v1387, %v1386
      %v1429 = vpack.c.bf16 %v1389, %v1388
      %v1430 = vpack.c.bf16 %v1391, %v1390
      %v1431 = vpack.c.bf16 %v1393, %v1392
      %v1432 = vpack.c.bf16 %v1395, %v1394
      %v1433 = vpack.c.bf16 %v1397, %v1396
      %v1434 = vpack.c.bf16 %v1399, %v1398
      %v1435 = vpack.c.bf16 %v1401, %v1400
      %v1436 = vpack.c.bf16 %v1403, %v1402
      %v1437 = vlaneseq
      %v1438 = vshrl.u32 %v1437, 7
      %v1439 = vsub.s32 4, %v1438
      %v1440 = vrot.slane %v229, %v1439
      %v1457 = vunpack.c.l.b16 %v1405
      %v1458 = vunpack.c.l.b16 %v1406
      %v1459 = vunpack.c.l.b16 %v1407
      %v1460 = vunpack.c.l.b16 %v1408
      %v1461 = vunpack.c.l.b16 %v1409
      %v1462 = vunpack.c.l.b16 %v1410
      %v1463 = vunpack.c.l.b16 %v1411
      %v1464 = vunpack.c.l.b16 %v1412
      %v1465 = vunpack.c.l.b16 %v1413
      %v1466 = vunpack.c.l.b16 %v1414
      %v1467 = vunpack.c.l.b16 %v1415
      %v1468 = vunpack.c.l.b16 %v1416
      %v1469 = vunpack.c.l.b16 %v1417
      %v1470 = vunpack.c.l.b16 %v1418
      %v1471 = vunpack.c.l.b16 %v1419
      %v1472 = vunpack.c.l.b16 %v1420
      %v1473 = vpack.c.b16 %v1458, %v1457
      %v1474 = vpack.c.b16 %v1460, %v1459
      %v1475 = vpack.c.b16 %v1462, %v1461
      %v1476 = vpack.c.b16 %v1464, %v1463
      %v1477 = vpack.c.b16 %v1466, %v1465
      %v1478 = vpack.c.b16 %v1468, %v1467
      %v1479 = vpack.c.b16 %v1470, %v1469
      %v1480 = vpack.c.b16 %v1472, %v1471
      %1489 = vmatprep.subr.bf16.mxu0 0
      %1490 = vmatpush1.bf16.msra.mxu0 %v1473
      %1491 = vmatprep.subr.bf16.mxu0 0
      %1492 = vmatpush1.bf16.msra.mxu0 %v1474
      %1493 = vmatprep.subr.bf16.mxu0 0
      %1494 = vmatpush1.bf16.msra.mxu0 %v1475
      %1495 = vmatprep.subr.bf16.mxu0 0
      %1496 = vmatpush1.bf16.msra.mxu0 %v1476
      %1497 = vmatprep.subr.bf16.mxu0 0
      %1498 = vmatpush1.bf16.msra.mxu0 %v1477
      %1499 = vmatprep.subr.bf16.mxu0 0
      %1500 = vmatpush1.bf16.msra.mxu0 %v1478
      %1501 = vmatprep.subr.bf16.mxu0 0
      %1502 = vmatpush1.bf16.msra.mxu0 %v1479
      %1503 = vmatprep.subr.bf16.mxu0 0
      %1504 = vmatpush1.bf16.msra.mxu0 %v1480
      %1505 = vmatprep.subr.bf16.mxu0 0
      %1506 = vmatpush1.bf16.msra.mxu0 0
      %1507 = vmatprep.subr.bf16.mxu0 0
      %1508 = vmatpush1.bf16.msra.mxu0 0
      %1509 = vmatprep.subr.bf16.mxu0 0
      %1510 = vmatpush1.bf16.msra.mxu0 0
      %1511 = vmatprep.subr.bf16.mxu0 0
      %1512 = vmatpush1.bf16.msra.mxu0 0
      %1513 = vmatprep.subr.bf16.mxu0 0
      %1514 = vmatpush1.bf16.msra.mxu0 0
      %1515 = vmatprep.subr.bf16.mxu0 0
      %1516 = vmatpush1.bf16.msra.mxu0 0
      %1517 = vmatprep.subr.bf16.mxu0 0
      %1518 = vmatpush1.bf16.msra.mxu0 0
      %1519 = vmatprep.subr.bf16.mxu0 0
      %1520 = vmatpush1.bf16.msra.mxu0 0
      %1521 = vmatprep.mubr.bf16.mxu0 0
      %1522 = vmatmul.mubr.bf16.gmra.mrb[0].mxu0 %v1421
      %v1523 = vpop.f32.mrb[0].mxu0
      %v1524 = vadd.f32 %v1440, %v1523
      %v1525 = vpop.f32.mrb[0].mxu0
      %v1526 = vpop.f32.mrb[0].mxu0
      %v1527 = vadd.f32 %v1440, %v1526
      %v1528 = vpop.f32.mrb[0].mxu0
      %1529 = vmatprep.mubr.bf16.mxu0 0
      %1530 = vmatmul.mubr.bf16.gmra.mrb[0].mxu0 %v1422
      %v1531 = vpop.f32.mrb[0].mxu0
      %v1532 = vadd.f32 %v1440, %v1531
      %v1533 = vpop.f32.mrb[0].mxu0
      %v1534 = vpop.f32.mrb[0].mxu0
      %v1535 = vadd.f32 %v1440, %v1534
      %v1536 = vpop.f32.mrb[0].mxu0
      %1537 = vmatprep.mubr.bf16.mxu0 0
      %1538 = vmatmul.mubr.bf16.gmra.mrb[0].mxu0 %v1423
      %v1539 = vpop.f32.mrb[0].mxu0
      %v1540 = vadd.f32 %v1440, %v1539
      %v1541 = vpop.f32.mrb[0].mxu0
      %v1542 = vpop.f32.mrb[0].mxu0
      %v1543 = vadd.f32 %v1440, %v1542
      %v1544 = vpop.f32.mrb[0].mxu0
      %1545 = vmatprep.mubr.bf16.mxu0 0
      %1546 = vmatmul.mubr.bf16.gmra.mrb[0].mxu0 %v1424
      %v1547 = vpop.f32.mrb[0].mxu0
      %v1548 = vadd.f32 %v1440, %v1547
      %v1549 = vpop.f32.mrb[0].mxu0
      %v1550 = vpop.f32.mrb[0].mxu0
      %v1551 = vadd.f32 %v1440, %v1550
      %v1552 = vpop.f32.mrb[0].mxu0
      %1553 = vmatprep.mubr.bf16.mxu0 0
      %1554 = vmatmul.mubr.bf16.gmra.mrb[0].mxu0 %v1425
      %v1555 = vpop.f32.mrb[0].mxu0
      %v1556 = vadd.f32 %v1440, %v1555
      %v1557 = vpop.f32.mrb[0].mxu0
      %v1558 = vpop.f32.mrb[0].mxu0
      %v1559 = vadd.f32 %v1440, %v1558
      %v1560 = vpop.f32.mrb[0].mxu0
      %1561 = vmatprep.mubr.bf16.mxu0 0
      %1562 = vmatmul.mubr.bf16.gmra.mrb[0].mxu0 %v1426
      %v1563 = vpop.f32.mrb[0].mxu0
      %v1564 = vadd.f32 %v1440, %v1563
      %v1565 = vpop.f32.mrb[0].mxu0
      %v1566 = vpop.f32.mrb[0].mxu0
      %v1567 = vadd.f32 %v1440, %v1566
      %v1568 = vpop.f32.mrb[0].mxu0
      %1569 = vmatprep.mubr.bf16.mxu0 0
      %1570 = vmatmul.mubr.bf16.gmra.mrb[0].mxu0 %v1427
      %v1571 = vpop.f32.mrb[0].mxu0
      %v1572 = vadd.f32 %v1440, %v1571
      %v1573 = vpop.f32.mrb[0].mxu0
      %v1574 = vpop.f32.mrb[0].mxu0
      %v1575 = vadd.f32 %v1440, %v1574
      %v1576 = vpop.f32.mrb[0].mxu0
      %1577 = vmatprep.mubr.bf16.mxu0 0
      %1578 = vmatmul.mubr.bf16.gmra.mrb[0].mxu0 %v1428
      %v1579 = vpop.f32.mrb[0].mxu0
      %v1580 = vadd.f32 %v1440, %v1579
      %v1581 = vpop.f32.mrb[0].mxu0
      %v1582 = vpop.f32.mrb[0].mxu0
      %v1583 = vadd.f32 %v1440, %v1582
      %v1584 = vpop.f32.mrb[0].mxu0
      %1585 = vmatprep.mubr.bf16.mxu0 0
      %1586 = vmatmul.mubr.bf16.gmra.mrb[0].mxu0 %v1429
      %v1587 = vpop.f32.mrb[0].mxu0
      %v1588 = vadd.f32 %v1440, %v1587
      %v1589 = vpop.f32.mrb[0].mxu0
      %v1590 = vpop.f32.mrb[0].mxu0
      %v1591 = vadd.f32 %v1440, %v1590
      %v1592 = vpop.f32.mrb[0].mxu0
      %1593 = vmatprep.mubr.bf16.mxu0 0
      %1594 = vmatmul.mubr.bf16.gmra.mrb[0].mxu0 %v1430
      %v1595 = vpop.f32.mrb[0].mxu0
      %v1596 = vadd.f32 %v1440, %v1595
      %v1597 = vpop.f32.mrb[0].mxu0
      %v1598 = vpop.f32.mrb[0].mxu0
      %v1599 = vadd.f32 %v1440, %v1598
      %v1600 = vpop.f32.mrb[0].mxu0
      %1601 = vmatprep.mubr.bf16.mxu0 0
      %1602 = vmatmul.mubr.bf16.gmra.mrb[0].mxu0 %v1431
      %v1603 = vpop.f32.mrb[0].mxu0
      %v1604 = vadd.f32 %v1440, %v1603
      %v1605 = vpop.f32.mrb[0].mxu0
      %v1606 = vpop.f32.mrb[0].mxu0
      %v1607 = vadd.f32 %v1440, %v1606
      %v1608 = vpop.f32.mrb[0].mxu0
      %1609 = vmatprep.mubr.bf16.mxu0 0
      %1610 = vmatmul.mubr.bf16.gmra.mrb[0].mxu0 %v1432
      %v1611 = vpop.f32.mrb[0].mxu0
      %v1612 = vadd.f32 %v1440, %v1611
      %v1613 = vpop.f32.mrb[0].mxu0
      %v1614 = vpop.f32.mrb[0].mxu0
      %v1615 = vadd.f32 %v1440, %v1614
      %v1616 = vpop.f32.mrb[0].mxu0
      %1617 = vmatprep.mubr.bf16.mxu0 0
      %1618 = vmatmul.mubr.bf16.gmra.mrb[0].mxu0 %v1433
      %v1619 = vpop.f32.mrb[0].mxu0
      %v1620 = vadd.f32 %v1440, %v1619
      %v1621 = vpop.f32.mrb[0].mxu0
      %v1622 = vpop.f32.mrb[0].mxu0
      %v1623 = vadd.f32 %v1440, %v1622
      %v1624 = vpop.f32.mrb[0].mxu0
      %1625 = vmatprep.mubr.bf16.mxu0 0
      %1626 = vmatmul.mubr.bf16.gmra.mrb[0].mxu0 %v1434
      %v1627 = vpop.f32.mrb[0].mxu0
      %v1628 = vadd.f32 %v1440, %v1627
      %v1629 = vpop.f32.mrb[0].mxu0
      %v1630 = vpop.f32.mrb[0].mxu0
      %v1631 = vadd.f32 %v1440, %v1630
      %v1632 = vpop.f32.mrb[0].mxu0
      %1633 = vmatprep.mubr.bf16.mxu0 0
      %1634 = vmatmul.mubr.bf16.gmra.mrb[0].mxu0 %v1435
      %v1635 = vpop.f32.mrb[0].mxu0
      %v1636 = vadd.f32 %v1440, %v1635
      %v1637 = vpop.f32.mrb[0].mxu0
      %v1638 = vpop.f32.mrb[0].mxu0
      %v1639 = vadd.f32 %v1440, %v1638
      %v1640 = vpop.f32.mrb[0].mxu0
      %1641 = vmatprep.mubr.bf16.mxu0 0
      %1642 = vmatmul.mubr.bf16.gmra.mrb[0].mxu0 %v1436
      %v1643 = vpop.f32.mrb[0].mxu0
      %v1644 = vadd.f32 %v1440, %v1643
      %v1645 = vpop.f32.mrb[0].mxu0
      %v1646 = vpop.f32.mrb[0].mxu0
      %v1647 = vadd.f32 %v1440, %v1646
      %v1648 = vpop.f32.mrb[0].mxu0
      %1649 = vdwg.mxu0
      %v1650 = vadd.f32 %v1094, %v1524
      %v1651 = vadd.f32 %v1095, %v1527
      %v1652 = vadd.f32 %v1096, %v1532
      %v1653 = vadd.f32 %v1097, %v1535
      %v1654 = vadd.f32 %v1098, %v1540
      %v1655 = vadd.f32 %v1099, %v1543
      %v1656 = vadd.f32 %v1100, %v1548
      %v1657 = vadd.f32 %v1101, %v1551
      %v1658 = vadd.f32 %v1102, %v1556
      %v1659 = vadd.f32 %v1103, %v1559
      %v1660 = vadd.f32 %v1104, %v1564
      %v1661 = vadd.f32 %v1105, %v1567
      %v1662 = vadd.f32 %v1106, %v1572
      %v1663 = vadd.f32 %v1107, %v1575
      %v1664 = vadd.f32 %v1108, %v1580
      %v1665 = vadd.f32 %v1109, %v1583
      %v1666 = vadd.f32 %v1110, %v1588
      %v1667 = vadd.f32 %v1111, %v1591
      %v1668 = vadd.f32 %v1112, %v1596
      %v1669 = vadd.f32 %v1113, %v1599
      %v1670 = vadd.f32 %v1114, %v1604
      %v1671 = vadd.f32 %v1115, %v1607
      %v1672 = vadd.f32 %v1116, %v1612
      %v1673 = vadd.f32 %v1117, %v1615
      %v1674 = vadd.f32 %v1118, %v1620
      %v1675 = vadd.f32 %v1119, %v1623
      %v1676 = vadd.f32 %v1120, %v1628
      %v1677 = vadd.f32 %v1121, %v1631
      %v1678 = vadd.f32 %v1122, %v1636
      %v1679 = vadd.f32 %v1123, %v1639
      %v1680 = vadd.f32 %v1124, %v1644
      %v1681 = vadd.f32 %v1125, %v1647
      %v1682 = vmax.f32 %v1650, 0.0
      %v1683 = vmax.f32 %v1651, 0.0
      %v1684 = vmax.f32 %v1652, 0.0
      %v1685 = vmax.f32 %v1653, 0.0
      %v1686 = vmax.f32 %v1654, 0.0
      %v1687 = vmax.f32 %v1655, 0.0
      %v1688 = vmax.f32 %v1656, 0.0
      %v1689 = vmax.f32 %v1657, 0.0
      %v1690 = vmax.f32 %v1658, 0.0
      %v1691 = vmax.f32 %v1659, 0.0
      %v1692 = vmax.f32 %v1660, 0.0
      %v1693 = vmax.f32 %v1661, 0.0
      %v1694 = vmax.f32 %v1662, 0.0
      %v1695 = vmax.f32 %v1663, 0.0
      %v1696 = vmax.f32 %v1664, 0.0
      %v1697 = vmax.f32 %v1665, 0.0
      %v1698 = vmax.f32 %v1666, 0.0
      %v1699 = vmax.f32 %v1667, 0.0
      %v1700 = vmax.f32 %v1668, 0.0
      %v1701 = vmax.f32 %v1669, 0.0
      %v1702 = vmax.f32 %v1670, 0.0
      %v1703 = vmax.f32 %v1671, 0.0
      %v1704 = vmax.f32 %v1672, 0.0
      %v1705 = vmax.f32 %v1673, 0.0
      %v1706 = vmax.f32 %v1674, 0.0
      %v1707 = vmax.f32 %v1675, 0.0
      %v1708 = vmax.f32 %v1676, 0.0
      %v1709 = vmax.f32 %v1677, 0.0
      %v1710 = vmax.f32 %v1678, 0.0
      %v1711 = vmax.f32 %v1679, 0.0
      %v1712 = vmax.f32 %v1680, 0.0
      %v1713 = vmax.f32 %v1681, 0.0
      %v1714 = vld [vmem:[%s3] sm:$0xf]
      %v1715 = vld [vmem:[%s3 + $0x4] sm:$0xf]
      %v1716 = vld [vmem:[%s3 + $0x8] sm:$0xf]
      %v1717 = vld [vmem:[%s3 + $0xc] sm:$0xf]
      %v1718 = vld [vmem:[%s3 + $0x10] sm:$0xf]
      %v1719 = vld [vmem:[%s3 + $0x14] sm:$0xf]
      %v1720 = vld [vmem:[%s3 + $0x18] sm:$0xf]
      %v1721 = vld [vmem:[%s3 + $0x1c] sm:$0xf]
      %v1722 = vld [vmem:[%s3 + $0x20] sm:$0xf]
      %v1723 = vld [vmem:[%s3 + $0x24] sm:$0xf]
      %v1724 = vld [vmem:[%s3 + $0x28] sm:$0xf]
      %v1725 = vld [vmem:[%s3 + $0x2c] sm:$0xf]
      %v1726 = vld [vmem:[%s3 + $0x30] sm:$0xf]
      %v1727 = vld [vmem:[%s3 + $0x34] sm:$0xf]
      %v1728 = vld [vmem:[%s3 + $0x38] sm:$0xf]
      %v1729 = vld [vmem:[%s3 + $0x3c] sm:$0xf]
      %v1730 = vpack.c.bf16 %v1683, %v1682
      %v1731 = vpack.c.bf16 %v1685, %v1684
      %v1732 = vpack.c.bf16 %v1687, %v1686
      %v1733 = vpack.c.bf16 %v1689, %v1688
      %v1734 = vpack.c.bf16 %v1691, %v1690
      %v1735 = vpack.c.bf16 %v1693, %v1692
      %v1736 = vpack.c.bf16 %v1695, %v1694
      %v1737 = vpack.c.bf16 %v1697, %v1696
      %v1738 = vpack.c.bf16 %v1699, %v1698
      %v1739 = vpack.c.bf16 %v1701, %v1700
      %v1740 = vpack.c.bf16 %v1703, %v1702
      %v1741 = vpack.c.bf16 %v1705, %v1704
      %v1742 = vpack.c.bf16 %v1707, %v1706
      %v1743 = vpack.c.bf16 %v1709, %v1708
      %v1744 = vpack.c.bf16 %v1711, %v1710
      %v1745 = vpack.c.bf16 %v1713, %v1712
      %v1746 = vlaneseq
      %v1747 = vshrl.u32 %v1746, 7
      %v1748 = vsub.s32 5, %v1747
      %v1749 = vrot.slane %v229, %v1748
      %v1766 = vunpack.c.l.b16 %v1714
      %v1767 = vunpack.c.l.b16 %v1715
      %v1768 = vunpack.c.l.b16 %v1716
      %v1769 = vunpack.c.l.b16 %v1717
      %v1770 = vunpack.c.l.b16 %v1718
      %v1771 = vunpack.c.l.b16 %v1719
      %v1772 = vunpack.c.l.b16 %v1720
      %v1773 = vunpack.c.l.b16 %v1721
      %v1774 = vunpack.c.l.b16 %v1722
      %v1775 = vunpack.c.l.b16 %v1723
      %v1776 = vunpack.c.l.b16 %v1724
      %v1777 = vunpack.c.l.b16 %v1725
      %v1778 = vunpack.c.l.b16 %v1726
      %v1779 = vunpack.c.l.b16 %v1727
      %v1780 = vunpack.c.l.b16 %v1728
      %v1781 = vunpack.c.l.b16 %v1729
      %v1782 = vpack.c.b16 %v1767, %v1766
      %v1783 = vpack.c.b16 %v1769, %v1768
      %v1784 = vpack.c.b16 %v1771, %v1770
      %v1785 = vpack.c.b16 %v1773, %v1772
      %v1786 = vpack.c.b16 %v1775, %v1774
      %v1787 = vpack.c.b16 %v1777, %v1776
      %v1788 = vpack.c.b16 %v1779, %v1778
      %v1789 = vpack.c.b16 %v1781, %v1780
      %1798 = vmatprep.subr.bf16.mxu0 0
      %1799 = vmatpush1.bf16.msra.mxu0 %v1782
      %1800 = vmatprep.subr.bf16.mxu0 0
      %1801 = vmatpush1.bf16.msra.mxu0 %v1783
      %1802 = vmatprep.subr.bf16.mxu0 0
      %1803 = vmatpush1.bf16.msra.mxu0 %v1784
      %1804 = vmatprep.subr.bf16.mxu0 0
      %1805 = vmatpush1.bf16.msra.mxu0 %v1785
      %1806 = vmatprep.subr.bf16.mxu0 0
      %1807 = vmatpush1.bf16.msra.mxu0 %v1786
      %1808 = vmatprep.subr.bf16.mxu0 0
      %1809 = vmatpush1.bf16.msra.mxu0 %v1787
      %1810 = vmatprep.subr.bf16.mxu0 0
      %1811 = vmatpush1.bf16.msra.mxu0 %v1788
      %1812 = vmatprep.subr.bf16.mxu0 0
      %1813 = vmatpush1.bf16.msra.mxu0 %v1789
      %1814 = vmatprep.subr.bf16.mxu0 0
      %1815 = vmatpush1.bf16.msra.mxu0 0
      %1816 = vmatprep.subr.bf16.mxu0 0
      %1817 = vmatpush1.bf16.msra.mxu0 0
      %1818 = vmatprep.subr.bf16.mxu0 0
      %1819 = vmatpush1.bf16.msra.mxu0 0
      %1820 = vmatprep.subr.bf16.mxu0 0
      %1821 = vmatpush1.bf16.msra.mxu0 0
      %1822 = vmatprep.subr.bf16.mxu0 0
      %1823 = vmatpush1.bf16.msra.mxu0 0
      %1824 = vmatprep.subr.bf16.mxu0 0
      %1825 = vmatpush1.bf16.msra.mxu0 0
      %1826 = vmatprep.subr.bf16.mxu0 0
      %1827 = vmatpush1.bf16.msra.mxu0 0
      %1828 = vmatprep.subr.bf16.mxu0 0
      %1829 = vmatpush1.bf16.msra.mxu0 0
      %1830 = vmatprep.mubr.bf16.mxu0 0
      %1831 = vmatmul.mubr.bf16.gmra.mrb[0].mxu0 %v1730
      %v1832 = vpop.f32.mrb[0].mxu0
      %v1833 = vadd.f32 %v1749, %v1832
      %v1834 = vpop.f32.mrb[0].mxu0
      %v1835 = vpop.f32.mrb[0].mxu0
      %v1836 = vadd.f32 %v1749, %v1835
      %v1837 = vpop.f32.mrb[0].mxu0
      %1838 = vmatprep.mubr.bf16.mxu0 0
      %1839 = vmatmul.mubr.bf16.gmra.mrb[0].mxu0 %v1731
      %v1840 = vpop.f32.mrb[0].mxu0
      %v1841 = vadd.f32 %v1749, %v1840
      %v1842 = vpop.f32.mrb[0].mxu0
      %v1843 = vpop.f32.mrb[0].mxu0
      %v1844 = vadd.f32 %v1749, %v1843
      %v1845 = vpop.f32.mrb[0].mxu0
      %1846 = vmatprep.mubr.bf16.mxu0 0
      %1847 = vmatmul.mubr.bf16.gmra.mrb[0].mxu0 %v1732
      %v1848 = vpop.f32.mrb[0].mxu0
      %v1849 = vadd.f32 %v1749, %v1848
      %v1850 = vpop.f32.mrb[0].mxu0
      %v1851 = vpop.f32.mrb[0].mxu0
      %v1852 = vadd.f32 %v1749, %v1851
      %v1853 = vpop.f32.mrb[0].mxu0
      %1854 = vmatprep.mubr.bf16.mxu0 0
      %1855 = vmatmul.mubr.bf16.gmra.mrb[0].mxu0 %v1733
      %v1856 = vpop.f32.mrb[0].mxu0
      %v1857 = vadd.f32 %v1749, %v1856
      %v1858 = vpop.f32.mrb[0].mxu0
      %v1859 = vpop.f32.mrb[0].mxu0
      %v1860 = vadd.f32 %v1749, %v1859
      %v1861 = vpop.f32.mrb[0].mxu0
      %1862 = vmatprep.mubr.bf16.mxu0 0
      %1863 = vmatmul.mubr.bf16.gmra.mrb[0].mxu0 %v1734
      %v1864 = vpop.f32.mrb[0].mxu0
      %v1865 = vadd.f32 %v1749, %v1864
      %v1866 = vpop.f32.mrb[0].mxu0
      %v1867 = vpop.f32.mrb[0].mxu0
      %v1868 = vadd.f32 %v1749, %v1867
      %v1869 = vpop.f32.mrb[0].mxu0
      %1870 = vmatprep.mubr.bf16.mxu0 0
      %1871 = vmatmul.mubr.bf16.gmra.mrb[0].mxu0 %v1735
      %v1872 = vpop.f32.mrb[0].mxu0
      %v1873 = vadd.f32 %v1749, %v1872
      %v1874 = vpop.f32.mrb[0].mxu0
      %v1875 = vpop.f32.mrb[0].mxu0
      %v1876 = vadd.f32 %v1749, %v1875
      %v1877 = vpop.f32.mrb[0].mxu0
      %1878 = vmatprep.mubr.bf16.mxu0 0
      %1879 = vmatmul.mubr.bf16.gmra.mrb[0].mxu0 %v1736
      %v1880 = vpop.f32.mrb[0].mxu0
      %v1881 = vadd.f32 %v1749, %v1880
      %v1882 = vpop.f32.mrb[0].mxu0
      %v1883 = vpop.f32.mrb[0].mxu0
      %v1884 = vadd.f32 %v1749, %v1883
      %v1885 = vpop.f32.mrb[0].mxu0
      %1886 = vmatprep.mubr.bf16.mxu0 0
      %1887 = vmatmul.mubr.bf16.gmra.mrb[0].mxu0 %v1737
      %v1888 = vpop.f32.mrb[0].mxu0
      %v1889 = vadd.f32 %v1749, %v1888
      %v1890 = vpop.f32.mrb[0].mxu0
      %v1891 = vpop.f32.mrb[0].mxu0
      %v1892 = vadd.f32 %v1749, %v1891
      %v1893 = vpop.f32.mrb[0].mxu0
      %1894 = vmatprep.mubr.bf16.mxu0 0
      %1895 = vmatmul.mubr.bf16.gmra.mrb[0].mxu0 %v1738
      %v1896 = vpop.f32.mrb[0].mxu0
      %v1897 = vadd.f32 %v1749, %v1896
      %v1898 = vpop.f32.mrb[0].mxu0
      %v1899 = vpop.f32.mrb[0].mxu0
      %v1900 = vadd.f32 %v1749, %v1899
      %v1901 = vpop.f32.mrb[0].mxu0
      %1902 = vmatprep.mubr.bf16.mxu0 0
      %1903 = vmatmul.mubr.bf16.gmra.mrb[0].mxu0 %v1739
      %v1904 = vpop.f32.mrb[0].mxu0
      %v1905 = vadd.f32 %v1749, %v1904
      %v1906 = vpop.f32.mrb[0].mxu0
      %v1907 = vpop.f32.mrb[0].mxu0
      %v1908 = vadd.f32 %v1749, %v1907
      %v1909 = vpop.f32.mrb[0].mxu0
      %1910 = vmatprep.mubr.bf16.mxu0 0
      %1911 = vmatmul.mubr.bf16.gmra.mrb[0].mxu0 %v1740
      %v1912 = vpop.f32.mrb[0].mxu0
      %v1913 = vadd.f32 %v1749, %v1912
      %v1914 = vpop.f32.mrb[0].mxu0
      %v1915 = vpop.f32.mrb[0].mxu0
      %v1916 = vadd.f32 %v1749, %v1915
      %v1917 = vpop.f32.mrb[0].mxu0
      %1918 = vmatprep.mubr.bf16.mxu0 0
      %1919 = vmatmul.mubr.bf16.gmra.mrb[0].mxu0 %v1741
      %v1920 = vpop.f32.mrb[0].mxu0
      %v1921 = vadd.f32 %v1749, %v1920
      %v1922 = vpop.f32.mrb[0].mxu0
      %v1923 = vpop.f32.mrb[0].mxu0
      %v1924 = vadd.f32 %v1749, %v1923
      %v1925 = vpop.f32.mrb[0].mxu0
      %1926 = vmatprep.mubr.bf16.mxu0 0
      %1927 = vmatmul.mubr.bf16.gmra.mrb[0].mxu0 %v1742
      %v1928 = vpop.f32.mrb[0].mxu0
      %v1929 = vadd.f32 %v1749, %v1928
      %v1930 = vpop.f32.mrb[0].mxu0
      %v1931 = vpop.f32.mrb[0].mxu0
      %v1932 = vadd.f32 %v1749, %v1931
      %v1933 = vpop.f32.mrb[0].mxu0
      %1934 = vmatprep.mubr.bf16.mxu0 0
      %1935 = vmatmul.mubr.bf16.gmra.mrb[0].mxu0 %v1743
      %v1936 = vpop.f32.mrb[0].mxu0
      %v1937 = vadd.f32 %v1749, %v1936
      %v1938 = vpop.f32.mrb[0].mxu0
      %v1939 = vpop.f32.mrb[0].mxu0
      %v1940 = vadd.f32 %v1749, %v1939
      %v1941 = vpop.f32.mrb[0].mxu0
      %1942 = vmatprep.mubr.bf16.mxu0 0
      %1943 = vmatmul.mubr.bf16.gmra.mrb[0].mxu0 %v1744
      %v1944 = vpop.f32.mrb[0].mxu0
      %v1945 = vadd.f32 %v1749, %v1944
      %v1946 = vpop.f32.mrb[0].mxu0
      %v1947 = vpop.f32.mrb[0].mxu0
      %v1948 = vadd.f32 %v1749, %v1947
      %v1949 = vpop.f32.mrb[0].mxu0
      %1950 = vmatprep.mubr.bf16.mxu0 0
      %1951 = vmatmul.mubr.bf16.gmra.mrb[0].mxu0 %v1745
      %v1952 = vpop.f32.mrb[0].mxu0
      %v1953 = vadd.f32 %v1749, %v1952
      %v1954 = vpop.f32.mrb[0].mxu0
      %v1955 = vpop.f32.mrb[0].mxu0
      %v1956 = vadd.f32 %v1749, %v1955
      %v1957 = vpop.f32.mrb[0].mxu0
      %1958 = vdwg.mxu0
      %1959 = vst [vmem:[%s226] sm:$0xff] %v1833
      %1960 = vst [vmem:[%s226 + $0x8] sm:$0xff] %v1836
      %1961 = vst [vmem:[%s226 + $0x10] sm:$0xff] %v1841
      %1962 = vst [vmem:[%s226 + $0x18] sm:$0xff] %v1844
      %1963 = vst [vmem:[%s226 + $0x20] sm:$0xff] %v1849
      %1964 = vst [vmem:[%s226 + $0x28] sm:$0xff] %v1852
      %1965 = vst [vmem:[%s226 + $0x30] sm:$0xff] %v1857
      %1966 = vst [vmem:[%s226 + $0x38] sm:$0xff] %v1860
      %1967 = vst [vmem:[%s226 + $0x40] sm:$0xff] %v1865
      %1968 = vst [vmem:[%s226 + $0x48] sm:$0xff] %v1868
      %1969 = vst [vmem:[%s226 + $0x50] sm:$0xff] %v1873
      %1970 = vst [vmem:[%s226 + $0x58] sm:$0xff] %v1876
      %1971 = vst [vmem:[%s226 + $0x60] sm:$0xff] %v1881
      %1972 = vst [vmem:[%s226 + $0x68] sm:$0xff] %v1884
      %1973 = vst [vmem:[%s226 + $0x70] sm:$0xff] %v1889
      %1974 = vst [vmem:[%s226 + $0x78] sm:$0xff] %v1892
      %1975 = vst [vmem:[%s226 + $0x80] sm:$0xff] %v1897
      %1976 = vst [vmem:[%s226 + $0x88] sm:$0xff] %v1900
      %1977 = vst [vmem:[%s226 + $0x90] sm:$0xff] %v1905
      %1978 = vst [vmem:[%s226 + $0x98] sm:$0xff] %v1908
      %1979 = vst [vmem:[%s226 + $0xa0] sm:$0xff] %v1913
      %1980 = vst [vmem:[%s226 + $0xa8] sm:$0xff] %v1916
      %1981 = vst [vmem:[%s226 + $0xb0] sm:$0xff] %v1921
      %1982 = vst [vmem:[%s226 + $0xb8] sm:$0xff] %v1924
      %1983 = vst [vmem:[%s226 + $0xc0] sm:$0xff] %v1929
      %1984 = vst [vmem:[%s226 + $0xc8] sm:$0xff] %v1932
      %1985 = vst [vmem:[%s226 + $0xd0] sm:$0xff] %v1937
      %1986 = vst [vmem:[%s226 + $0xd8] sm:$0xff] %v1940
      %1987 = vst [vmem:[%s226 + $0xe0] sm:$0xff] %v1945
      %1988 = vst [vmem:[%s226 + $0xe8] sm:$0xff] %v1948
      %1989 = vst [vmem:[%s226 + $0xf0] sm:$0xff] %v1953
      %1990 = vst [vmem:[%s226 + $0xf8] sm:$0xff] %v1956
      %s1991 = smul.u32 32, %s16
      %p1992 = scmp.lt.s32.totalorder %s1991, 63
      %s1993 = scalar_select %p1992, %s1991, 63
      %s1994 = smul.addr %s1993, 8
      %s1995 = scalar_lea.vmem %s5, %s1994
      // Predicated region
      $region41: #{residual_nn_forward.1} parent=39 // pred_check
        %p1996 = pneg %p144
      $region42: #{residual_nn_forward.1} parent=39 // pred_check_branch
        %1998 = sbr.rel (%p1996) target = $region44
      $region43: #{residual_nn_forward.1} parent=39 // pred_region
        %s1999 = smul.u32 32, %s16
      $region44: #{residual_nn_forward.1} parent=39 // pred_fallthru
        _
    $region40: #{residual_nn_forward.1} parent=5 // pred_fallthru
      _
    %p2000 = scmp.le.s32.totalorder 2, %s11
    // Predicated region
    $region45: #{residual_nn_forward.1} parent=5 // pred_check
      %p2001 = pneg %p2000
    $region46: #{residual_nn_forward.1} parent=5 // pred_check_branch
      %2003 = sbr.rel (%p2001) target = $region48
    $region47: #{residual_nn_forward.1} parent=5 // pred_region
      %s2004 = ssub.s32 %s11, 2
      // Predicated region
      $region49: #{residual_nn_forward.1} parent=47 // pred_check
        %p2005 = pneg %p150
      $region50: #{residual_nn_forward.1} parent=47 // pred_check_branch
        %2007 = sbr.rel (%p2005) target = $region52
      $region51: #{residual_nn_forward.1} parent=47 // pred_region
        %s2008 = smul.u32 32, %s17
        %p2009 = scmp.lt.s32.totalorder %s2008, 63
        %s2010 = scalar_select %p2009, %s2008, 63
        %s2011 = smul.addr %s2010, 8
        %s2012 = scalar_lea.vmem %s5, %s2011
      $region52: #{residual_nn_forward.1} parent=47 // pred_fallthru
        _
    $region48: #{residual_nn_forward.1} parent=5 // pred_fallthru
      _
  $region6: #{residual_nn_forward.1} parent=0 // loop_footer
    %s15 = sadd.s32 1, %s11
  $region7: #{residual_nn_forward.1} parent=0 // loop_footer_branch
    %10 = sbr.rel target = $region3
  $region8: #{residual_nn_forward.1} parent=0 // loop_exit
    _

</llo_original>
